<compile_context>
chip_gen: v5e
topology: v5e:2x2
jax: 0.10.0
libtpu: 0.0.40
codegen_flags: <defaults>
</compile_context>

<pallas_src>
import functools

import numpy as np
import jax
import jax.numpy as jnp
from jax import lax
from jax.experimental import pallas as pl
from jax.experimental.pallas import tpu as pltpu


def bigru_kernel(x_ref, lens_ref, wih_ref, whh_f_ref, whh_b_ref,
                 bgi_ref, bhhn_f_ref, bhhn_b_ref,
                 out_ref, hn_ref, gi_ref, *, hidden_dim):
    S, B, E = x_ref.shape
    H = hidden_dim

    # ---- hoisted input projection (both directions at once) -----------------
    # One well-shaped (S*B, E) @ (E, 6H) matmul instead of 2*S tiny ones.
    # bih (all gates) and bhh (r, z gates) are already folded into bgi.
    x_all = x_ref[...].reshape(S * B, E)
    gi_all = jnp.dot(x_all, wih_ref[...], preferred_element_type=jnp.float32)
    gi_all = gi_all + bgi_ref[...]
    gi_ref[...] = gi_all.reshape(S, B, 6 * H)

    lens = lens_ref[...]                       # (B, 1) int32
    bhhn_f = bhhn_f_ref[...]                   # (1, H)
    bhhn_b = bhhn_b_ref[...]                   # (1, H)

    def gru_cell(h, gi_t, whh_ref, bhh_n):
        # PyTorch GRU gate order: r, z, n.  Only the recurrent matmul and the
        # n-gate hidden bias remain on the serial critical path.
        gh = jnp.dot(h, whh_ref[...], preferred_element_type=jnp.float32)
        r = jax.nn.sigmoid(gi_t[:, 0:H] + gh[:, 0:H])
        z = jax.nn.sigmoid(gi_t[:, H:2 * H] + gh[:, H:2 * H])
        n = jnp.tanh(gi_t[:, 2 * H:3 * H] + r * (gh[:, 2 * H:3 * H] + bhh_n))
        return (1.0 - z) * n + z * h

    h_f = jnp.zeros((B, H), jnp.float32)
    h_b = jnp.zeros((B, H), jnp.float32)

    # Statically unrolled: iteration i advances forward step t=i and backward
    # step t=S-1-i.  The two chains are independent, so their MXU / EUP
    # latencies hide behind each other within a bundle window.
    for i in range(S):
        tf = i
        tb = S - 1 - i
        m_f = lens > tf                        # (B, 1) bool
        m_b = lens > tb

        hf_new = gru_cell(h_f, gi_ref[tf, :, 0:3 * H], whh_f_ref, bhhn_f)
        hb_new = gru_cell(h_b, gi_ref[tb, :, 3 * H:6 * H], whh_b_ref, bhhn_b)

        h_f = jnp.where(m_f, hf_new, h_f)      # freeze state past sequence end
        h_b = jnp.where(m_b, hb_new, h_b)

        out_ref[tf, :, 0:H] = jnp.where(m_f, hf_new, 0.0)       # pad -> zeros
        out_ref[tb, :, H:2 * H] = jnp.where(m_b, hb_new, 0.0)

    hn_ref[:, 0:H] = h_f                       # fwd hidden at step len-1
    hn_ref[:, H:2 * H] = h_b                   # bwd hidden at t = 0


def bigru_pallas(x_tme, lens_b1, params, hidden_dim):
    S, B, E = x_tme.shape
    H = hidden_dim

    # Concatenate the two directions' input weights: one (E, 6H) matmul.
    wih = jnp.concatenate([params["wih_f"], params["wih_b"]], axis=1)       # (E, 6H)

    # Fold bih (all gates) and bhh (r, z gates) into the precomputed projection bias.
    zero_h = jnp.zeros((1, H), jnp.float32)
    bgi_f = params["bih_f"] + jnp.concatenate([params["bhh_f"][:, :2 * H], zero_h], axis=1)
    bgi_b = params["bih_b"] + jnp.concatenate([params["bhh_b"][:, :2 * H], zero_h], axis=1)
    bgi = jnp.concatenate([bgi_f, bgi_b], axis=1)                            # (1, 6H)
    bhhn_f = params["bhh_f"][:, 2 * H:3 * H]                                 # (1, H)
    bhhn_b = params["bhh_b"][:, 2 * H:3 * H]                                 # (1, H)

    kernel = functools.partial(bigru_kernel, hidden_dim=H)
    vmem = pl.BlockSpec(memory_space=pltpu.MemorySpace.VMEM)
    return pl.pallas_call(
        kernel,
        out_shape=(
            jax.ShapeDtypeStruct((S, B, 2 * H), jnp.float32),   # [fwd | bwd] stream
            jax.ShapeDtypeStruct((B, 2 * H), jnp.float32),      # [fwd | bwd] final hidden
        ),
        in_specs=[vmem] * 8,
        out_specs=(vmem, vmem),
        scratch_shapes=[pltpu.VMEM((S, B, 6 * H), jnp.float32)],  # hoisted projections
    )(x_tme, lens_b1, wih, params["whh_f"], params["whh_b"], bgi, bhhn_f, bhhn_b)


def rnn_encoder_forward(input_x, params, hidden_dim):
    """Eval-mode forward of RNN_Encoder. input_x: (B, S) int32 token ids."""
    B, S = input_x.shape
    lengths = jnp.maximum(jnp.sum((input_x != 0).astype(jnp.int32), axis=1), 1)  # (B,)

    # Embedding lookup (glue, plain JAX gather).
    emb = jnp.take(params["emb"], input_x, axis=0).astype(jnp.float32)   # (B, S, E)
    x_tme = jnp.transpose(emb, (1, 0, 2))                                # (S, B, E)

    out, hn = bigru_pallas(x_tme, lengths[:, None].astype(jnp.int32), params, hidden_dim)

    gru_out = jnp.transpose(out, (1, 0, 2))                              # (B, S, 2H)
    # TODO(synk): pad_packed_sequence trims to max(lengths); we return the full
    # padded length S (tail positions are exactly zero) so the caller can slice
    # without a device->host sync inside the forward.

    # hn.permute(1,0,2).reshape(sent_len, -1): identical to (B, 2H) when B == sent_len.
    hn = hn.reshape(S, -1)

    # drop_layer (p=0.5) is identity in eval mode.
    return gru_out, hn


# ----------------------------- pure numpy reference -----------------------------
def ref_forward(input_x, params, hidden_dim):
    x = np.asarray(input_x)
    B, S = x.shape
    H = hidden_dim
    emb = np.asarray(params["emb"], np.float64)
    lengths = np.maximum((x != 0).sum(1), 1)
    xe = emb[x]

    def step(h, xt, wih, whh, bih, bhh):
        gi = xt @ wih + bih[0]
        gh = h @ whh + bhh[0]
        r = 1.0 / (1.0 + np.exp(-(gi[:H] + gh[:H])))
        z = 1.0 / (1.0 + np.exp(-(gi[H:2 * H] + gh[H:2 * H])))
        n = np.tanh(gi[2 * H:] + r * gh[2 * H:])
        return (1.0 - z) * n + z * h

    wih_f = np.asarray(params["wih_f"], np.float64); whh_f = np.asarray(params["whh_f"], np.float64)
    bih_f = np.asarray(params["bih_f"], np.float64); bhh_f = np.asarray(params["bhh_f"], np.float64)
    wih_b = np.asarray(params["wih_b"], np.float64); whh_b = np.asarray(params["whh_b"], np.float64)
    bih_b = np.asarray(params["bih_b"], np.float64); bhh_b = np.asarray(params["bhh_b"], np.float64)

    out = np.zeros((B, S, 2 * H))
    hn = np.zeros((B, 2 * H))
    for b in range(B):
        L = int(lengths[b])
        h = np.zeros(H)
        for t in range(L):
            h = step(h, xe[b, t], wih_f, whh_f, bih_f, bhh_f)
            out[b, t, :H] = h
        hn[b, :H] = h
        h = np.zeros(H)
        for t in range(L - 1, -1, -1):
            h = step(h, xe[b, t], wih_b, whh_b, bih_b, bhh_b)
            out[b, t, H:] = h
        hn[b, H:] = h
    # Full padded length S (positions past each row's length are zero).
    return out, hn.reshape(S, -1)


def init_params(key, vocab_size, emb_size, hidden_dim):
    ks = jax.random.split(key, 9)
    scale = 1.0 / np.sqrt(hidden_dim)
    u = lambda k, shape: jax.random.uniform(k, shape, jnp.float32, -scale, scale)
    params = {
        "emb": jax.random.normal(ks[0], (vocab_size, emb_size), jnp.float32) * 0.1,
        # stored pre-transposed: (in_dim, 3H) / (H, 3H); biases as (1, 3H)
        "wih_f": u(ks[1], (emb_size, 3 * hidden_dim)),
        "whh_f": u(ks[2], (hidden_dim, 3 * hidden_dim)),
        "bih_f": u(ks[3], (1, 3 * hidden_dim)),
        "bhh_f": u(ks[4], (1, 3 * hidden_dim)),
        "wih_b": u(ks[5], (emb_size, 3 * hidden_dim)),
        "whh_b": u(ks[6], (hidden_dim, 3 * hidden_dim)),
        "bih_b": u(ks[7], (1, 3 * hidden_dim)),
        "bhh_b": u(ks[8], (1, 3 * hidden_dim)),
    }
    return params


if __name__ == "__main__":
    VOCAB, EMB, HIDDEN = 20, 32, 32
    BATCH = SEQ = 8  # batch == sent_len so the module's hn.reshape(sent_len, -1) is exact

    key = jax.random.PRNGKey(0)
    k_param, k_x = jax.random.split(key)
    params = init_params(k_param, VOCAB, EMB, HIDDEN)
    input_x = jax.random.randint(k_x, (BATCH, SEQ), 0, VOCAB, dtype=jnp.int32)

    fwd = jax.jit(lambda x: rnn_encoder_forward(x, params, HIDDEN))
    gru_out, hn = fwd(input_x)
    gru_out = jax.block_until_ready(gru_out)
    hn = jax.block_until_ready(hn)

    ref_out, ref_hn = ref_forward(input_x, params, HIDDEN)
    # Default (non-HIGHEST) MXU precision -> bf16-rounded operands; tolerance relaxed.
    np.testing.assert_allclose(np.asarray(gru_out), ref_out, atol=5e-3, rtol=5e-3)
    np.testing.assert_allclose(np.asarray(hn), ref_hn, atol=5e-3, rtol=5e-3)

    print("KERNEL_OK")
</pallas_src>

<mosaic_0001>
module attributes {stable_mosaic.version = 11 : i64} {
  func.func @bigru_kernel(%arg0: memref<8x8x32xf32, #tpu.memory_space<vmem>>, %arg1: memref<8x1xi32, #tpu.memory_space<vmem>>, %arg2: memref<32x192xf32, #tpu.memory_space<vmem>>, %arg3: memref<32x96xf32, #tpu.memory_space<vmem>>, %arg4: memref<32x96xf32, #tpu.memory_space<vmem>>, %arg5: memref<1x192xf32, #tpu.memory_space<vmem>>, %arg6: memref<1x32xf32, #tpu.memory_space<vmem>>, %arg7: memref<1x32xf32, #tpu.memory_space<vmem>>, %arg8: memref<8x8x64xf32, #tpu.memory_space<vmem>>, %arg9: memref<8x64xf32, #tpu.memory_space<vmem>>, %arg10: memref<8x8x192xf32, #tpu.memory_space<vmem>>) attributes {dimension_semantics = [], scalar_prefetch = 0 : i64, scratch_operands = 1 : i64, tpu.core_type = #tpu.core_type<tc>} {
    %c0 = arith.constant 0 : index
    %c0_0 = arith.constant 0 : index
    %c0_1 = arith.constant 0 : index
    %0 = vector.load %arg0[%c0, %c0_0, %c0_1] : memref<8x8x32xf32, #tpu.memory_space<vmem>>, vector<8x8x32xf32>
    %1 = vector.shape_cast %0 : vector<8x8x32xf32> to vector<64x32xf32>
    %c0_2 = arith.constant 0 : index
    %c0_3 = arith.constant 0 : index
    %2 = vector.load %arg2[%c0_2, %c0_3] : memref<32x192xf32, #tpu.memory_space<vmem>>, vector<32x192xf32>
    %cst = arith.constant dense<0.000000e+00> : vector<64x192xf32>
    %3 = tpu.matmul %1, %2, %cst {dimension_numbers = #tpu.dot_dimension_numbers<[1], [0], [0], [1], [0, 0, 1, 1], [], []>} : vector<64x32xf32>, vector<32x192xf32>, vector<64x192xf32> -> vector<64x192xf32>
    %c0_4 = arith.constant 0 : index
    %c0_5 = arith.constant 0 : index
    %4 = vector.load %arg5[%c0_4, %c0_5] : memref<1x192xf32, #tpu.memory_space<vmem>>, vector<1x192xf32>
    %5 = vector.broadcast %4 : vector<1x192xf32> to vector<64x192xf32>
    %6 = arith.addf %3, %5 : vector<64x192xf32>
    %7 = vector.shape_cast %6 : vector<64x192xf32> to vector<8x8x192xf32>
    %c0_6 = arith.constant 0 : index
    %c0_7 = arith.constant 0 : index
    %c0_8 = arith.constant 0 : index
    %8 = vector.load %arg10[%c0_6, %c0_7, %c0_8] : memref<8x8x192xf32, #tpu.memory_space<vmem>>, vector<8x8x192xf32>
    tpu.vector_store %arg10[%c0_6, %c0_7, %c0_8], %7 {strides = array<i32>} : memref<8x8x192xf32, #tpu.memory_space<vmem>>, vector<8x8x192xf32>,
    %c0_9 = arith.constant 0 : index
    %c0_10 = arith.constant 0 : index
    %9 = vector.load %arg1[%c0_9, %c0_10] : memref<8x1xi32, #tpu.memory_space<vmem>>, vector<8x1xi32>
    %c0_11 = arith.constant 0 : index
    %c0_12 = arith.constant 0 : index
    %10 = vector.load %arg6[%c0_11, %c0_12] : memref<1x32xf32, #tpu.memory_space<vmem>>, vector<1x32xf32>
    %c0_13 = arith.constant 0 : index
    %c0_14 = arith.constant 0 : index
    %11 = vector.load %arg7[%c0_13, %c0_14] : memref<1x32xf32, #tpu.memory_space<vmem>>, vector<1x32xf32>
    %cst_15 = arith.constant 0.000000e+00 : f32
    %12 = vector.broadcast %cst_15 : f32 to vector<8x32xf32>
    %cst_16 = arith.constant 0.000000e+00 : f32
    %13 = vector.broadcast %cst_16 : f32 to vector<8x32xf32>
    %c0_i32 = arith.constant 0 : i32
    %14 = vector.broadcast %c0_i32 : i32 to vector<8x1xi32>
    %15 = arith.cmpi sgt, %9, %14 : vector<8x1xi32>
    %c7_i32 = arith.constant 7 : i32
    %16 = vector.broadcast %c7_i32 : i32 to vector<8x1xi32>
    %17 = arith.cmpi sgt, %9, %16 : vector<8x1xi32>
    %c0_17 = arith.constant 0 : index
    %c0_18 = arith.constant 0 : index
    %c0_19 = arith.constant 0 : index
    %18 = vector.load %arg10[%c0_17, %c0_18, %c0_19] : memref<8x8x192xf32, #tpu.memory_space<vmem>>, vector<1x8x96xf32>
    %19 = vector.shape_cast %18 : vector<1x8x96xf32> to vector<8x96xf32>
    %c0_20 = arith.constant 0 : index
    %c0_21 = arith.constant 0 : index
    %20 = vector.load %arg3[%c0_20, %c0_21] : memref<32x96xf32, #tpu.memory_space<vmem>>, vector<32x96xf32>
    %cst_22 = arith.constant dense<0.000000e+00> : vector<8x96xf32>
    %21 = tpu.matmul %12, %20, %cst_22 {dimension_numbers = #tpu.dot_dimension_numbers<[1], [0], [0], [1], [0, 0, 1, 1], [], []>} : vector<8x32xf32>, vector<32x96xf32>, vector<8x96xf32> -> vector<8x96xf32>
    %22 = vector.extract_strided_slice %19 {offsets = [0, 0], sizes = [8, 32], strides = [1, 1]} : vector<8x96xf32> to vector<8x32xf32>
    %23 = vector.extract_strided_slice %21 {offsets = [0, 0], sizes = [8, 32], strides = [1, 1]} : vector<8x96xf32> to vector<8x32xf32>
    %24 = arith.addf %22, %23 : vector<8x32xf32>
    %25 = arith.negf %24 : vector<8x32xf32>
    %26 = math.exp %25 : vector<8x32xf32>
    %cst_23 = arith.constant 1.000000e+00 : f32
    %27 = vector.broadcast %cst_23 : f32 to vector<8x32xf32>
    %28 = arith.addf %27, %26 : vector<8x32xf32>
    %29 = arith.divf %27, %28 : vector<8x32xf32>
    %30 = vector.extract_strided_slice %19 {offsets = [0, 32], sizes = [8, 32], strides = [1, 1]} : vector<8x96xf32> to vector<8x32xf32>
    %31 = vector.extract_strided_slice %21 {offsets = [0, 32], sizes = [8, 32], strides = [1, 1]} : vector<8x96xf32> to vector<8x32xf32>
    %32 = arith.addf %30, %31 : vector<8x32xf32>
    %33 = arith.negf %32 : vector<8x32xf32>
    %34 = math.exp %33 : vector<8x32xf32>
    %cst_24 = arith.constant 1.000000e+00 : f32
    %35 = vector.broadcast %cst_24 : f32 to vector<8x32xf32>
    %36 = arith.addf %35, %34 : vector<8x32xf32>
    %37 = arith.divf %35, %36 : vector<8x32xf32>
    %38 = vector.extract_strided_slice %19 {offsets = [0, 64], sizes = [8, 32], strides = [1, 1]} : vector<8x96xf32> to vector<8x32xf32>
    %39 = vector.extract_strided_slice %21 {offsets = [0, 64], sizes = [8, 32], strides = [1, 1]} : vector<8x96xf32> to vector<8x32xf32>
    %40 = vector.broadcast %10 : vector<1x32xf32> to vector<8x32xf32>
    %41 = arith.addf %39, %40 : vector<8x32xf32>
    %42 = arith.mulf %29, %41 : vector<8x32xf32>
    %43 = arith.addf %38, %42 : vector<8x32xf32>
    %44 = math.tanh %43 : vector<8x32xf32>
    %cst_25 = arith.constant 1.000000e+00 : f32
    %45 = vector.broadcast %cst_25 : f32 to vector<8x32xf32>
    %46 = arith.subf %45, %37 : vector<8x32xf32>
    %47 = arith.mulf %46, %44 : vector<8x32xf32>
    %48 = arith.mulf %37, %12 : vector<8x32xf32>
    %49 = arith.addf %47, %48 : vector<8x32xf32>
    %c7 = arith.constant 7 : index
    %c0_26 = arith.constant 0 : index
    %c96 = arith.constant 96 : index
    %50 = vector.load %arg10[%c7, %c0_26, %c96] : memref<8x8x192xf32, #tpu.memory_space<vmem>>, vector<1x8x96xf32>
    %51 = vector.shape_cast %50 : vector<1x8x96xf32> to vector<8x96xf32>
    %c0_27 = arith.constant 0 : index
    %c0_28 = arith.constant 0 : index
    %52 = vector.load %arg4[%c0_27, %c0_28] : memref<32x96xf32, #tpu.memory_space<vmem>>, vector<32x96xf32>
    %cst_29 = arith.constant dense<0.000000e+00> : vector<8x96xf32>
    %53 = tpu.matmul %13, %52, %cst_29 {dimension_numbers = #tpu.dot_dimension_numbers<[1], [0], [0], [1], [0, 0, 1, 1], [], []>} : vector<8x32xf32>, vector<32x96xf32>, vector<8x96xf32> -> vector<8x96xf32>
    %54 = vector.extract_strided_slice %51 {offsets = [0, 0], sizes = [8, 32], strides = [1, 1]} : vector<8x96xf32> to vector<8x32xf32>
    %55 = vector.extract_strided_slice %53 {offsets = [0, 0], sizes = [8, 32], strides = [1, 1]} : vector<8x96xf32> to vector<8x32xf32>
    %56 = arith.addf %54, %55 : vector<8x32xf32>
    %57 = arith.negf %56 : vector<8x32xf32>
    %58 = math.exp %57 : vector<8x32xf32>
    %cst_30 = arith.constant 1.000000e+00 : f32
    %59 = vector.broadcast %cst_30 : f32 to vector<8x32xf32>
    %60 = arith.addf %59, %58 : vector<8x32xf32>
    %61 = arith.divf %59, %60 : vector<8x32xf32>
    %62 = vector.extract_strided_slice %51 {offsets = [0, 32], sizes = [8, 32], strides = [1, 1]} : vector<8x96xf32> to vector<8x32xf32>
    %63 = vector.extract_strided_slice %53 {offsets = [0, 32], sizes = [8, 32], strides = [1, 1]} : vector<8x96xf32> to vector<8x32xf32>
    %64 = arith.addf %62, %63 : vector<8x32xf32>
    %65 = arith.negf %64 : vector<8x32xf32>
    %66 = math.exp %65 : vector<8x32xf32>
    %cst_31 = arith.constant 1.000000e+00 : f32
    %67 = vector.broadcast %cst_31 : f32 to vector<8x32xf32>
    %68 = arith.addf %67, %66 : vector<8x32xf32>
    %69 = arith.divf %67, %68 : vector<8x32xf32>
    %70 = vector.extract_strided_slice %51 {offsets = [0, 64], sizes = [8, 32], strides = [1, 1]} : vector<8x96xf32> to vector<8x32xf32>
    %71 = vector.extract_strided_slice %53 {offsets = [0, 64], sizes = [8, 32], strides = [1, 1]} : vector<8x96xf32> to vector<8x32xf32>
    %72 = vector.broadcast %11 : vector<1x32xf32> to vector<8x32xf32>
    %73 = arith.addf %71, %72 : vector<8x32xf32>
    %74 = arith.mulf %61, %73 : vector<8x32xf32>
    %75 = arith.addf %70, %74 : vector<8x32xf32>
    %76 = math.tanh %75 : vector<8x32xf32>
    %cst_32 = arith.constant 1.000000e+00 : f32
    %77 = vector.broadcast %cst_32 : f32 to vector<8x32xf32>
    %78 = arith.subf %77, %69 : vector<8x32xf32>
    %79 = arith.mulf %78, %76 : vector<8x32xf32>
    %80 = arith.mulf %69, %13 : vector<8x32xf32>
    %81 = arith.addf %79, %80 : vector<8x32xf32>
    %82 = vector.shape_cast %15 : vector<8x1xi1> to vector<8x1xi1>
    %83 = vector.broadcast %82 : vector<8x1xi1> to vector<8x32xi1>
    %84 = arith.select %83, %49, %12 : vector<8x32xi1>, vector<8x32xf32>
    %85 = vector.shape_cast %17 : vector<8x1xi1> to vector<8x1xi1>
    %86 = vector.broadcast %85 : vector<8x1xi1> to vector<8x32xi1>
    %87 = arith.select %86, %81, %13 : vector<8x32xi1>, vector<8x32xf32>
    %cst_33 = arith.constant 0.000000e+00 : f32
    %88 = vector.shape_cast %15 : vector<8x1xi1> to vector<8x1xi1>
    %89 = vector.broadcast %88 : vector<8x1xi1> to vector<8x32xi1>
    %90 = vector.broadcast %cst_33 : f32 to vector<8x32xf32>
    %91 = arith.select %89, %49, %90 : vector<8x32xi1>, vector<8x32xf32>
    %c0_34 = arith.constant 0 : index
    %c0_35 = arith.constant 0 : index
    %c0_36 = arith.constant 0 : index
    %92 = vector.load %arg8[%c0_34, %c0_35, %c0_36] : memref<8x8x64xf32, #tpu.memory_space<vmem>>, vector<1x8x32xf32>
    %93 = vector.shape_cast %92 : vector<1x8x32xf32> to vector<8x32xf32>
    %94 = vector.shape_cast %91 : vector<8x32xf32> to vector<1x8x32xf32>
    tpu.vector_store %arg8[%c0_34, %c0_35, %c0_36], %94 {strides = array<i32>} : memref<8x8x64xf32, #tpu.memory_space<vmem>>, vector<1x8x32xf32>,
    %cst_37 = arith.constant 0.000000e+00 : f32
    %95 = vector.shape_cast %17 : vector<8x1xi1> to vector<8x1xi1>
    %96 = vector.broadcast %95 : vector<8x1xi1> to vector<8x32xi1>
    %97 = vector.broadcast %cst_37 : f32 to vector<8x32xf32>
    %98 = arith.select %96, %81, %97 : vector<8x32xi1>, vector<8x32xf32>
    %c7_38 = arith.constant 7 : index
    %c0_39 = arith.constant 0 : index
    %c32 = arith.constant 32 : index
    %99 = vector.load %arg8[%c7_38, %c0_39, %c32] : memref<8x8x64xf32, #tpu.memory_space<vmem>>, vector<1x8x32xf32>
    %100 = vector.shape_cast %99 : vector<1x8x32xf32> to vector<8x32xf32>
    %101 = vector.shape_cast %98 : vector<8x32xf32> to vector<1x8x32xf32>
    tpu.vector_store %arg8[%c7_38, %c0_39, %c32], %101 {strides = array<i32>} : memref<8x8x64xf32, #tpu.memory_space<vmem>>, vector<1x8x32xf32>,
    %c1_i32 = arith.constant 1 : i32
    %102 = vector.broadcast %c1_i32 : i32 to vector<8x1xi32>
    %103 = arith.cmpi sgt, %9, %102 : vector<8x1xi32>
    %c6_i32 = arith.constant 6 : i32
    %104 = vector.broadcast %c6_i32 : i32 to vector<8x1xi32>
    %105 = arith.cmpi sgt, %9, %104 : vector<8x1xi32>
    %c1 = arith.constant 1 : index
    %c0_40 = arith.constant 0 : index
    %c0_41 = arith.constant 0 : index
    %106 = vector.load %arg10[%c1, %c0_40, %c0_41] : memref<8x8x192xf32, #tpu.memory_space<vmem>>, vector<1x8x96xf32>
    %107 = vector.shape_cast %106 : vector<1x8x96xf32> to vector<8x96xf32>
    %c0_42 = arith.constant 0 : index
    %c0_43 = arith.constant 0 : index
    %108 = vector.load %arg3[%c0_42, %c0_43] : memref<32x96xf32, #tpu.memory_space<vmem>>, vector<32x96xf32>
    %cst_44 = arith.constant dense<0.000000e+00> : vector<8x96xf32>
    %109 = tpu.matmul %84, %108, %cst_44 {dimension_numbers = #tpu.dot_dimension_numbers<[1], [0], [0], [1], [0, 0, 1, 1], [], []>} : vector<8x32xf32>, vector<32x96xf32>, vector<8x96xf32> -> vector<8x96xf32>
    %110 = vector.extract_strided_slice %107 {offsets = [0, 0], sizes = [8, 32], strides = [1, 1]} : vector<8x96xf32> to vector<8x32xf32>
    %111 = vector.extract_strided_slice %109 {offsets = [0, 0], sizes = [8, 32], strides = [1, 1]} : vector<8x96xf32> to vector<8x32xf32>
    %112 = arith.addf %110, %111 : vector<8x32xf32>
    %113 = arith.negf %112 : vector<8x32xf32>
    %114 = math.exp %113 : vector<8x32xf32>
    %cst_45 = arith.constant 1.000000e+00 : f32
    %115 = vector.broadcast %cst_45 : f32 to vector<8x32xf32>
    %116 = arith.addf %115, %114 : vector<8x32xf32>
    %117 = arith.divf %115, %116 : vector<8x32xf32>
    %118 = vector.extract_strided_slice %107 {offsets = [0, 32], sizes = [8, 32], strides = [1, 1]} : vector<8x96xf32> to vector<8x32xf32>
    %119 = vector.extract_strided_slice %109 {offsets = [0, 32], sizes = [8, 32], strides = [1, 1]} : vector<8x96xf32> to vector<8x32xf32>
    %120 = arith.addf %118, %119 : vector<8x32xf32>
    %121 = arith.negf %120 : vector<8x32xf32>
    %122 = math.exp %121 : vector<8x32xf32>
    %cst_46 = arith.constant 1.000000e+00 : f32
    %123 = vector.broadcast %cst_46 : f32 to vector<8x32xf32>
    %124 = arith.addf %123, %122 : vector<8x32xf32>
    %125 = arith.divf %123, %124 : vector<8x32xf32>
    %126 = vector.extract_strided_slice %107 {offsets = [0, 64], sizes = [8, 32], strides = [1, 1]} : vector<8x96xf32> to vector<8x32xf32>
    %127 = vector.extract_strided_slice %109 {offsets = [0, 64], sizes = [8, 32], strides = [1, 1]} : vector<8x96xf32> to vector<8x32xf32>
    %128 = vector.broadcast %10 : vector<1x32xf32> to vector<8x32xf32>
    %129 = arith.addf %127, %128 : vector<8x32xf32>
    %130 = arith.mulf %117, %129 : vector<8x32xf32>
    %131 = arith.addf %126, %130 : vector<8x32xf32>
    %132 = math.tanh %131 : vector<8x32xf32>
    %cst_47 = arith.constant 1.000000e+00 : f32
    %133 = vector.broadcast %cst_47 : f32 to vector<8x32xf32>
    %134 = arith.subf %133, %125 : vector<8x32xf32>
    %135 = arith.mulf %134, %132 : vector<8x32xf32>
    %136 = arith.mulf %125, %84 : vector<8x32xf32>
    %137 = arith.addf %135, %136 : vector<8x32xf32>
    %c6 = arith.constant 6 : index
    %c0_48 = arith.constant 0 : index
    %c96_49 = arith.constant 96 : index
    %138 = vector.load %arg10[%c6, %c0_48, %c96_49] : memref<8x8x192xf32, #tpu.memory_space<vmem>>, vector<1x8x96xf32>
    %139 = vector.shape_cast %138 : vector<1x8x96xf32> to vector<8x96xf32>
    %c0_50 = arith.constant 0 : index
    %c0_51 = arith.constant 0 : index
    %140 = vector.load %arg4[%c0_50, %c0_51] : memref<32x96xf32, #tpu.memory_space<vmem>>, vector<32x96xf32>
    %cst_52 = arith.constant dense<0.000000e+00> : vector<8x96xf32>
    %141 = tpu.matmul %87, %140, %cst_52 {dimension_numbers = #tpu.dot_dimension_numbers<[1], [0], [0], [1], [0, 0, 1, 1], [], []>} : vector<8x32xf32>, vector<32x96xf32>, vector<8x96xf32> -> vector<8x96xf32>
    %142 = vector.extract_strided_slice %139 {offsets = [0, 0], sizes = [8, 32], strides = [1, 1]} : vector<8x96xf32> to vector<8x32xf32>
    %143 = vector.extract_strided_slice %141 {offsets = [0, 0], sizes = [8, 32], strides = [1, 1]} : vector<8x96xf32> to vector<8x32xf32>
    %144 = arith.addf %142, %143 : vector<8x32xf32>
    %145 = arith.negf %144 : vector<8x32xf32>
    %146 = math.exp %145 : vector<8x32xf32>
    %cst_53 = arith.constant 1.000000e+00 : f32
    %147 = vector.broadcast %cst_53 : f32 to vector<8x32xf32>
    %148 = arith.addf %147, %146 : vector<8x32xf32>
    %149 = arith.divf %147, %148 : vector<8x32xf32>
    %150 = vector.extract_strided_slice %139 {offsets = [0, 32], sizes = [8, 32], strides = [1, 1]} : vector<8x96xf32> to vector<8x32xf32>
    %151 = vector.extract_strided_slice %141 {offsets = [0, 32], sizes = [8, 32], strides = [1, 1]} : vector<8x96xf32> to vector<8x32xf32>
    %152 = arith.addf %150, %151 : vector<8x32xf32>
    %153 = arith.negf %152 : vector<8x32xf32>
    %154 = math.exp %153 : vector<8x32xf32>
    %cst_54 = arith.constant 1.000000e+00 : f32
    %155 = vector.broadcast %cst_54 : f32 to vector<8x32xf32>
    %156 = arith.addf %155, %154 : vector<8x32xf32>
    %157 = arith.divf %155, %156 : vector<8x32xf32>
    %158 = vector.extract_strided_slice %139 {offsets = [0, 64], sizes = [8, 32], strides = [1, 1]} : vector<8x96xf32> to vector<8x32xf32>
    %159 = vector.extract_strided_slice %141 {offsets = [0, 64], sizes = [8, 32], strides = [1, 1]} : vector<8x96xf32> to vector<8x32xf32>
    %160 = vector.broadcast %11 : vector<1x32xf32> to vector<8x32xf32>
    %161 = arith.addf %159, %160 : vector<8x32xf32>
    %162 = arith.mulf %149, %161 : vector<8x32xf32>
    %163 = arith.addf %158, %162 : vector<8x32xf32>
    %164 = math.tanh %163 : vector<8x32xf32>
    %cst_55 = arith.constant 1.000000e+00 : f32
    %165 = vector.broadcast %cst_55 : f32 to vector<8x32xf32>
    %166 = arith.subf %165, %157 : vector<8x32xf32>
    %167 = arith.mulf %166, %164 : vector<8x32xf32>
    %168 = arith.mulf %157, %87 : vector<8x32xf32>
    %169 = arith.addf %167, %168 : vector<8x32xf32>
    %170 = vector.shape_cast %103 : vector<8x1xi1> to vector<8x1xi1>
    %171 = vector.broadcast %170 : vector<8x1xi1> to vector<8x32xi1>
    %172 = arith.select %171, %137, %84 : vector<8x32xi1>, vector<8x32xf32>
    %173 = vector.shape_cast %105 : vector<8x1xi1> to vector<8x1xi1>
    %174 = vector.broadcast %173 : vector<8x1xi1> to vector<8x32xi1>
    %175 = arith.select %174, %169, %87 : vector<8x32xi1>, vector<8x32xf32>
    %cst_56 = arith.constant 0.000000e+00 : f32
    %176 = vector.shape_cast %103 : vector<8x1xi1> to vector<8x1xi1>
    %177 = vector.broadcast %176 : vector<8x1xi1> to vector<8x32xi1>
    %178 = vector.broadcast %cst_56 : f32 to vector<8x32xf32>
    %179 = arith.select %177, %137, %178 : vector<8x32xi1>, vector<8x32xf32>
    %c1_57 = arith.constant 1 : index
    %c0_58 = arith.constant 0 : index
    %c0_59 = arith.constant 0 : index
    %180 = vector.load %arg8[%c1_57, %c0_58, %c0_59] : memref<8x8x64xf32, #tpu.memory_space<vmem>>, vector<1x8x32xf32>
    %181 = vector.shape_cast %180 : vector<1x8x32xf32> to vector<8x32xf32>
    %182 = vector.shape_cast %179 : vector<8x32xf32> to vector<1x8x32xf32>
    tpu.vector_store %arg8[%c1_57, %c0_58, %c0_59], %182 {strides = array<i32>} : memref<8x8x64xf32, #tpu.memory_space<vmem>>, vector<1x8x32xf32>,
    %cst_60 = arith.constant 0.000000e+00 : f32
    %183 = vector.shape_cast %105 : vector<8x1xi1> to vector<8x1xi1>
    %184 = vector.broadcast %183 : vector<8x1xi1> to vector<8x32xi1>
    %185 = vector.broadcast %cst_60 : f32 to vector<8x32xf32>
    %186 = arith.select %184, %169, %185 : vector<8x32xi1>, vector<8x32xf32>
    %c6_61 = arith.constant 6 : index
    %c0_62 = arith.constant 0 : index
    %c32_63 = arith.constant 32 : index
    %187 = vector.load %arg8[%c6_61, %c0_62, %c32_63] : memref<8x8x64xf32, #tpu.memory_space<vmem>>, vector<1x8x32xf32>
    %188 = vector.shape_cast %187 : vector<1x8x32xf32> to vector<8x32xf32>
    %189 = vector.shape_cast %186 : vector<8x32xf32> to vector<1x8x32xf32>
    tpu.vector_store %arg8[%c6_61, %c0_62, %c32_63], %189 {strides = array<i32>} : memref<8x8x64xf32, #tpu.memory_space<vmem>>, vector<1x8x32xf32>,
    %c2_i32 = arith.constant 2 : i32
    %190 = vector.broadcast %c2_i32 : i32 to vector<8x1xi32>
    %191 = arith.cmpi sgt, %9, %190 : vector<8x1xi32>
    %c5_i32 = arith.constant 5 : i32
    %192 = vector.broadcast %c5_i32 : i32 to vector<8x1xi32>
    %193 = arith.cmpi sgt, %9, %192 : vector<8x1xi32>
    %c2 = arith.constant 2 : index
    %c0_64 = arith.constant 0 : index
    %c0_65 = arith.constant 0 : index
    %194 = vector.load %arg10[%c2, %c0_64, %c0_65] : memref<8x8x192xf32, #tpu.memory_space<vmem>>, vector<1x8x96xf32>
    %195 = vector.shape_cast %194 : vector<1x8x96xf32> to vector<8x96xf32>
    %c0_66 = arith.constant 0 : index
    %c0_67 = arith.constant 0 : index
    %196 = vector.load %arg3[%c0_66, %c0_67] : memref<32x96xf32, #tpu.memory_space<vmem>>, vector<32x96xf32>
    %cst_68 = arith.constant dense<0.000000e+00> : vector<8x96xf32>
    %197 = tpu.matmul %172, %196, %cst_68 {dimension_numbers = #tpu.dot_dimension_numbers<[1], [0], [0], [1], [0, 0, 1, 1], [], []>} : vector<8x32xf32>, vector<32x96xf32>, vector<8x96xf32> -> vector<8x96xf32>
    %198 = vector.extract_strided_slice %195 {offsets = [0, 0], sizes = [8, 32], strides = [1, 1]} : vector<8x96xf32> to vector<8x32xf32>
    %199 = vector.extract_strided_slice %197 {offsets = [0, 0], sizes = [8, 32], strides = [1, 1]} : vector<8x96xf32> to vector<8x32xf32>
    %200 = arith.addf %198, %199 : vector<8x32xf32>
    %201 = arith.negf %200 : vector<8x32xf32>
    %202 = math.exp %201 : vector<8x32xf32>
    %cst_69 = arith.constant 1.000000e+00 : f32
    %203 = vector.broadcast %cst_69 : f32 to vector<8x32xf32>
    %204 = arith.addf %203, %202 : vector<8x32xf32>
    %205 = arith.divf %203, %204 : vector<8x32xf32>
    %206 = vector.extract_strided_slice %195 {offsets = [0, 32], sizes = [8, 32], strides = [1, 1]} : vector<8x96xf32> to vector<8x32xf32>
    %207 = vector.extract_strided_slice %197 {offsets = [0, 32], sizes = [8, 32], strides = [1, 1]} : vector<8x96xf32> to vector<8x32xf32>
    %208 = arith.addf %206, %207 : vector<8x32xf32>
    %209 = arith.negf %208 : vector<8x32xf32>
    %210 = math.exp %209 : vector<8x32xf32>
    %cst_70 = arith.constant 1.000000e+00 : f32
    %211 = vector.broadcast %cst_70 : f32 to vector<8x32xf32>
    %212 = arith.addf %211, %210 : vector<8x32xf32>
    %213 = arith.divf %211, %212 : vector<8x32xf32>
    %214 = vector.extract_strided_slice %195 {offsets = [0, 64], sizes = [8, 32], strides = [1, 1]} : vector<8x96xf32> to vector<8x32xf32>
    %215 = vector.extract_strided_slice %197 {offsets = [0, 64], sizes = [8, 32], strides = [1, 1]} : vector<8x96xf32> to vector<8x32xf32>
    %216 = vector.broadcast %10 : vector<1x32xf32> to vector<8x32xf32>
    %217 = arith.addf %215, %216 : vector<8x32xf32>
    %218 = arith.mulf %205, %217 : vector<8x32xf32>
    %219 = arith.addf %214, %218 : vector<8x32xf32>
    %220 = math.tanh %219 : vector<8x32xf32>
    %cst_71 = arith.constant 1.000000e+00 : f32
    %221 = vector.broadcast %cst_71 : f32 to vector<8x32xf32>
    %222 = arith.subf %221, %213 : vector<8x32xf32>
    %223 = arith.mulf %222, %220 : vector<8x32xf32>
    %224 = arith.mulf %213, %172 : vector<8x32xf32>
    %225 = arith.addf %223, %224 : vector<8x32xf32>
    %c5 = arith.constant 5 : index
    %c0_72 = arith.constant 0 : index
    %c96_73 = arith.constant 96 : index
    %226 = vector.load %arg10[%c5, %c0_72, %c96_73] : memref<8x8x192xf32, #tpu.memory_space<vmem>>, vector<1x8x96xf32>
    %227 = vector.shape_cast %226 : vector<1x8x96xf32> to vector<8x96xf32>
    %c0_74 = arith.constant 0 : index
    %c0_75 = arith.constant 0 : index
    %228 = vector.load %arg4[%c0_74, %c0_75] : memref<32x96xf32, #tpu.memory_space<vmem>>, vector<32x96xf32>
    %cst_76 = arith.constant dense<0.000000e+00> : vector<8x96xf32>
    %229 = tpu.matmul %175, %228, %cst_76 {dimension_numbers = #tpu.dot_dimension_numbers<[1], [0], [0], [1], [0, 0, 1, 1], [], []>} : vector<8x32xf32>, vector<32x96xf32>, vector<8x96xf32> -> vector<8x96xf32>
    %230 = vector.extract_strided_slice %227 {offsets = [0, 0], sizes = [8, 32], strides = [1, 1]} : vector<8x96xf32> to vector<8x32xf32>
    %231 = vector.extract_strided_slice %229 {offsets = [0, 0], sizes = [8, 32], strides = [1, 1]} : vector<8x96xf32> to vector<8x32xf32>
    %232 = arith.addf %230, %231 : vector<8x32xf32>
    %233 = arith.negf %232 : vector<8x32xf32>
    %234 = math.exp %233 : vector<8x32xf32>
    %cst_77 = arith.constant 1.000000e+00 : f32
    %235 = vector.broadcast %cst_77 : f32 to vector<8x32xf32>
    %236 = arith.addf %235, %234 : vector<8x32xf32>
    %237 = arith.divf %235, %236 : vector<8x32xf32>
    %238 = vector.extract_strided_slice %227 {offsets = [0, 32], sizes = [8, 32], strides = [1, 1]} : vector<8x96xf32> to vector<8x32xf32>
    %239 = vector.extract_strided_slice %229 {offsets = [0, 32], sizes = [8, 32], strides = [1, 1]} : vector<8x96xf32> to vector<8x32xf32>
    %240 = arith.addf %238, %239 : vector<8x32xf32>
    %241 = arith.negf %240 : vector<8x32xf32>
    %242 = math.exp %241 : vector<8x32xf32>
    %cst_78 = arith.constant 1.000000e+00 : f32
    %243 = vector.broadcast %cst_78 : f32 to vector<8x32xf32>
    %244 = arith.addf %243, %242 : vector<8x32xf32>
    %245 = arith.divf %243, %244 : vector<8x32xf32>
    %246 = vector.extract_strided_slice %227 {offsets = [0, 64], sizes = [8, 32], strides = [1, 1]} : vector<8x96xf32> to vector<8x32xf32>
    %247 = vector.extract_strided_slice %229 {offsets = [0, 64], sizes = [8, 32], strides = [1, 1]} : vector<8x96xf32> to vector<8x32xf32>
    %248 = vector.broadcast %11 : vector<1x32xf32> to vector<8x32xf32>
    %249 = arith.addf %247, %248 : vector<8x32xf32>
    %250 = arith.mulf %237, %249 : vector<8x32xf32>
    %251 = arith.addf %246, %250 : vector<8x32xf32>
    %252 = math.tanh %251 : vector<8x32xf32>
    %cst_79 = arith.constant 1.000000e+00 : f32
    %253 = vector.broadcast %cst_79 : f32 to vector<8x32xf32>
    %254 = arith.subf %253, %245 : vector<8x32xf32>
    %255 = arith.mulf %254, %252 : vector<8x32xf32>
    %256 = arith.mulf %245, %175 : vector<8x32xf32>
    %257 = arith.addf %255, %256 : vector<8x32xf32>
    %258 = vector.shape_cast %191 : vector<8x1xi1> to vector<8x1xi1>
    %259 = vector.broadcast %258 : vector<8x1xi1> to vector<8x32xi1>
    %260 = arith.select %259, %225, %172 : vector<8x32xi1>, vector<8x32xf32>
    %261 = vector.shape_cast %193 : vector<8x1xi1> to vector<8x1xi1>
    %262 = vector.broadcast %261 : vector<8x1xi1> to vector<8x32xi1>
    %263 = arith.select %262, %257, %175 : vector<8x32xi1>, vector<8x32xf32>
    %cst_80 = arith.constant 0.000000e+00 : f32
    %264 = vector.shape_cast %191 : vector<8x1xi1> to vector<8x1xi1>
    %265 = vector.broadcast %264 : vector<8x1xi1> to vector<8x32xi1>
    %266 = vector.broadcast %cst_80 : f32 to vector<8x32xf32>
    %267 = arith.select %265, %225, %266 : vector<8x32xi1>, vector<8x32xf32>
    %c2_81 = arith.constant 2 : index
    %c0_82 = arith.constant 0 : index
    %c0_83 = arith.constant 0 : index
    %268 = vector.load %arg8[%c2_81, %c0_82, %c0_83] : memref<8x8x64xf32, #tpu.memory_space<vmem>>, vector<1x8x32xf32>
    %269 = vector.shape_cast %268 : vector<1x8x32xf32> to vector<8x32xf32>
    %270 = vector.shape_cast %267 : vector<8x32xf32> to vector<1x8x32xf32>
    tpu.vector_store %arg8[%c2_81, %c0_82, %c0_83], %270 {strides = array<i32>} : memref<8x8x64xf32, #tpu.memory_space<vmem>>, vector<1x8x32xf32>,
    %cst_84 = arith.constant 0.000000e+00 : f32
    %271 = vector.shape_cast %193 : vector<8x1xi1> to vector<8x1xi1>
    %272 = vector.broadcast %271 : vector<8x1xi1> to vector<8x32xi1>
    %273 = vector.broadcast %cst_84 : f32 to vector<8x32xf32>
    %274 = arith.select %272, %257, %273 : vector<8x32xi1>, vector<8x32xf32>
    %c5_85 = arith.constant 5 : index
    %c0_86 = arith.constant 0 : index
    %c32_87 = arith.constant 32 : index
    %275 = vector.load %arg8[%c5_85, %c0_86, %c32_87] : memref<8x8x64xf32, #tpu.memory_space<vmem>>, vector<1x8x32xf32>
    %276 = vector.shape_cast %275 : vector<1x8x32xf32> to vector<8x32xf32>
    %277 = vector.shape_cast %274 : vector<8x32xf32> to vector<1x8x32xf32>
    tpu.vector_store %arg8[%c5_85, %c0_86, %c32_87], %277 {strides = array<i32>} : memref<8x8x64xf32, #tpu.memory_space<vmem>>, vector<1x8x32xf32>,
    %c3_i32 = arith.constant 3 : i32
    %278 = vector.broadcast %c3_i32 : i32 to vector<8x1xi32>
    %279 = arith.cmpi sgt, %9, %278 : vector<8x1xi32>
    %c4_i32 = arith.constant 4 : i32
    %280 = vector.broadcast %c4_i32 : i32 to vector<8x1xi32>
    %281 = arith.cmpi sgt, %9, %280 : vector<8x1xi32>
    %c3 = arith.constant 3 : index
    %c0_88 = arith.constant 0 : index
    %c0_89 = arith.constant 0 : index
    %282 = vector.load %arg10[%c3, %c0_88, %c0_89] : memref<8x8x192xf32, #tpu.memory_space<vmem>>, vector<1x8x96xf32>
    %283 = vector.shape_cast %282 : vector<1x8x96xf32> to vector<8x96xf32>
    %c0_90 = arith.constant 0 : index
    %c0_91 = arith.constant 0 : index
    %284 = vector.load %arg3[%c0_90, %c0_91] : memref<32x96xf32, #tpu.memory_space<vmem>>, vector<32x96xf32>
    %cst_92 = arith.constant dense<0.000000e+00> : vector<8x96xf32>
    %285 = tpu.matmul %260, %284, %cst_92 {dimension_numbers = #tpu.dot_dimension_numbers<[1], [0], [0], [1], [0, 0, 1, 1], [], []>} : vector<8x32xf32>, vector<32x96xf32>, vector<8x96xf32> -> vector<8x96xf32>
    %286 = vector.extract_strided_slice %283 {offsets = [0, 0], sizes = [8, 32], strides = [1, 1]} : vector<8x96xf32> to vector<8x32xf32>
    %287 = vector.extract_strided_slice %285 {offsets = [0, 0], sizes = [8, 32], strides = [1, 1]} : vector<8x96xf32> to vector<8x32xf32>
    %288 = arith.addf %286, %287 : vector<8x32xf32>
    %289 = arith.negf %288 : vector<8x32xf32>
    %290 = math.exp %289 : vector<8x32xf32>
    %cst_93 = arith.constant 1.000000e+00 : f32
    %291 = vector.broadcast %cst_93 : f32 to vector<8x32xf32>
    %292 = arith.addf %291, %290 : vector<8x32xf32>
    %293 = arith.divf %291, %292 : vector<8x32xf32>
    %294 = vector.extract_strided_slice %283 {offsets = [0, 32], sizes = [8, 32], strides = [1, 1]} : vector<8x96xf32> to vector<8x32xf32>
    %295 = vector.extract_strided_slice %285 {offsets = [0, 32], sizes = [8, 32], strides = [1, 1]} : vector<8x96xf32> to vector<8x32xf32>
    %296 = arith.addf %294, %295 : vector<8x32xf32>
    %297 = arith.negf %296 : vector<8x32xf32>
    %298 = math.exp %297 : vector<8x32xf32>
    %cst_94 = arith.constant 1.000000e+00 : f32
    %299 = vector.broadcast %cst_94 : f32 to vector<8x32xf32>
    %300 = arith.addf %299, %298 : vector<8x32xf32>
    %301 = arith.divf %299, %300 : vector<8x32xf32>
    %302 = vector.extract_strided_slice %283 {offsets = [0, 64], sizes = [8, 32], strides = [1, 1]} : vector<8x96xf32> to vector<8x32xf32>
    %303 = vector.extract_strided_slice %285 {offsets = [0, 64], sizes = [8, 32], strides = [1, 1]} : vector<8x96xf32> to vector<8x32xf32>
    %304 = vector.broadcast %10 : vector<1x32xf32> to vector<8x32xf32>
    %305 = arith.addf %303, %304 : vector<8x32xf32>
    %306 = arith.mulf %293, %305 : vector<8x32xf32>
    %307 = arith.addf %302, %306 : vector<8x32xf32>
    %308 = math.tanh %307 : vector<8x32xf32>
    %cst_95 = arith.constant 1.000000e+00 : f32
    %309 = vector.broadcast %cst_95 : f32 to vector<8x32xf32>
    %310 = arith.subf %309, %301 : vector<8x32xf32>
    %311 = arith.mulf %310, %308 : vector<8x32xf32>
    %312 = arith.mulf %301, %260 : vector<8x32xf32>
    %313 = arith.addf %311, %312 : vector<8x32xf32>
    %c4 = arith.constant 4 : index
    %c0_96 = arith.constant 0 : index
    %c96_97 = arith.constant 96 : index
    %314 = vector.load %arg10[%c4, %c0_96, %c96_97] : memref<8x8x192xf32, #tpu.memory_space<vmem>>, vector<1x8x96xf32>
    %315 = vector.shape_cast %314 : vector<1x8x96xf32> to vector<8x96xf32>
    %c0_98 = arith.constant 0 : index
    %c0_99 = arith.constant 0 : index
    %316 = vector.load %arg4[%c0_98, %c0_99] : memref<32x96xf32, #tpu.memory_space<vmem>>, vector<32x96xf32>
    %cst_100 = arith.constant dense<0.000000e+00> : vector<8x96xf32>
    %317 = tpu.matmul %263, %316, %cst_100 {dimension_numbers = #tpu.dot_dimension_numbers<[1], [0], [0], [1], [0, 0, 1, 1], [], []>} : vector<8x32xf32>, vector<32x96xf32>, vector<8x96xf32> -> vector<8x96xf32>
    %318 = vector.extract_strided_slice %315 {offsets = [0, 0], sizes = [8, 32], strides = [1, 1]} : vector<8x96xf32> to vector<8x32xf32>
    %319 = vector.extract_strided_slice %317 {offsets = [0, 0], sizes = [8, 32], strides = [1, 1]} : vector<8x96xf32> to vector<8x32xf32>
    %320 = arith.addf %318, %319 : vector<8x32xf32>
    %321 = arith.negf %320 : vector<8x32xf32>
    %322 = math.exp %321 : vector<8x32xf32>
    %cst_101 = arith.constant 1.000000e+00 : f32
    %323 = vector.broadcast %cst_101 : f32 to vector<8x32xf32>
    %324 = arith.addf %323, %322 : vector<8x32xf32>
    %325 = arith.divf %323, %324 : vector<8x32xf32>
    %326 = vector.extract_strided_slice %315 {offsets = [0, 32], sizes = [8, 32], strides = [1, 1]} : vector<8x96xf32> to vector<8x32xf32>
    %327 = vector.extract_strided_slice %317 {offsets = [0, 32], sizes = [8, 32], strides = [1, 1]} : vector<8x96xf32> to vector<8x32xf32>
    %328 = arith.addf %326, %327 : vector<8x32xf32>
    %329 = arith.negf %328 : vector<8x32xf32>
    %330 = math.exp %329 : vector<8x32xf32>
    %cst_102 = arith.constant 1.000000e+00 : f32
    %331 = vector.broadcast %cst_102 : f32 to vector<8x32xf32>
    %332 = arith.addf %331, %330 : vector<8x32xf32>
    %333 = arith.divf %331, %332 : vector<8x32xf32>
    %334 = vector.extract_strided_slice %315 {offsets = [0, 64], sizes = [8, 32], strides = [1, 1]} : vector<8x96xf32> to vector<8x32xf32>
    %335 = vector.extract_strided_slice %317 {offsets = [0, 64], sizes = [8, 32], strides = [1, 1]} : vector<8x96xf32> to vector<8x32xf32>
    %336 = vector.broadcast %11 : vector<1x32xf32> to vector<8x32xf32>
    %337 = arith.addf %335, %336 : vector<8x32xf32>
    %338 = arith.mulf %325, %337 : vector<8x32xf32>
    %339 = arith.addf %334, %338 : vector<8x32xf32>
    %340 = math.tanh %339 : vector<8x32xf32>
    %cst_103 = arith.constant 1.000000e+00 : f32
    %341 = vector.broadcast %cst_103 : f32 to vector<8x32xf32>
    %342 = arith.subf %341, %333 : vector<8x32xf32>
    %343 = arith.mulf %342, %340 : vector<8x32xf32>
    %344 = arith.mulf %333, %263 : vector<8x32xf32>
    %345 = arith.addf %343, %344 : vector<8x32xf32>
    %346 = vector.shape_cast %279 : vector<8x1xi1> to vector<8x1xi1>
    %347 = vector.broadcast %346 : vector<8x1xi1> to vector<8x32xi1>
    %348 = arith.select %347, %313, %260 : vector<8x32xi1>, vector<8x32xf32>
    %349 = vector.shape_cast %281 : vector<8x1xi1> to vector<8x1xi1>
    %350 = vector.broadcast %349 : vector<8x1xi1> to vector<8x32xi1>
    %351 = arith.select %350, %345, %263 : vector<8x32xi1>, vector<8x32xf32>
    %cst_104 = arith.constant 0.000000e+00 : f32
    %352 = vector.shape_cast %279 : vector<8x1xi1> to vector<8x1xi1>
    %353 = vector.broadcast %352 : vector<8x1xi1> to vector<8x32xi1>
    %354 = vector.broadcast %cst_104 : f32 to vector<8x32xf32>
    %355 = arith.select %353, %313, %354 : vector<8x32xi1>, vector<8x32xf32>
    %c3_105 = arith.constant 3 : index
    %c0_106 = arith.constant 0 : index
    %c0_107 = arith.constant 0 : index
    %356 = vector.load %arg8[%c3_105, %c0_106, %c0_107] : memref<8x8x64xf32, #tpu.memory_space<vmem>>, vector<1x8x32xf32>
    %357 = vector.shape_cast %356 : vector<1x8x32xf32> to vector<8x32xf32>
    %358 = vector.shape_cast %355 : vector<8x32xf32> to vector<1x8x32xf32>
    tpu.vector_store %arg8[%c3_105, %c0_106, %c0_107], %358 {strides = array<i32>} : memref<8x8x64xf32, #tpu.memory_space<vmem>>, vector<1x8x32xf32>,
    %cst_108 = arith.constant 0.000000e+00 : f32
    %359 = vector.shape_cast %281 : vector<8x1xi1> to vector<8x1xi1>
    %360 = vector.broadcast %359 : vector<8x1xi1> to vector<8x32xi1>
    %361 = vector.broadcast %cst_108 : f32 to vector<8x32xf32>
    %362 = arith.select %360, %345, %361 : vector<8x32xi1>, vector<8x32xf32>
    %c4_109 = arith.constant 4 : index
    %c0_110 = arith.constant 0 : index
    %c32_111 = arith.constant 32 : index
    %363 = vector.load %arg8[%c4_109, %c0_110, %c32_111] : memref<8x8x64xf32, #tpu.memory_space<vmem>>, vector<1x8x32xf32>
    %364 = vector.shape_cast %363 : vector<1x8x32xf32> to vector<8x32xf32>
    %365 = vector.shape_cast %362 : vector<8x32xf32> to vector<1x8x32xf32>
    tpu.vector_store %arg8[%c4_109, %c0_110, %c32_111], %365 {strides = array<i32>} : memref<8x8x64xf32, #tpu.memory_space<vmem>>, vector<1x8x32xf32>,
    %c4_i32_112 = arith.constant 4 : i32
    %366 = vector.broadcast %c4_i32_112 : i32 to vector<8x1xi32>
    %367 = arith.cmpi sgt, %9, %366 : vector<8x1xi32>
    %c3_i32_113 = arith.constant 3 : i32
    %368 = vector.broadcast %c3_i32_113 : i32 to vector<8x1xi32>
    %369 = arith.cmpi sgt, %9, %368 : vector<8x1xi32>
    %c4_114 = arith.constant 4 : index
    %c0_115 = arith.constant 0 : index
    %c0_116 = arith.constant 0 : index
    %370 = vector.load %arg10[%c4_114, %c0_115, %c0_116] : memref<8x8x192xf32, #tpu.memory_space<vmem>>, vector<1x8x96xf32>
    %371 = vector.shape_cast %370 : vector<1x8x96xf32> to vector<8x96xf32>
    %c0_117 = arith.constant 0 : index
    %c0_118 = arith.constant 0 : index
    %372 = vector.load %arg3[%c0_117, %c0_118] : memref<32x96xf32, #tpu.memory_space<vmem>>, vector<32x96xf32>
    %cst_119 = arith.constant dense<0.000000e+00> : vector<8x96xf32>
    %373 = tpu.matmul %348, %372, %cst_119 {dimension_numbers = #tpu.dot_dimension_numbers<[1], [0], [0], [1], [0, 0, 1, 1], [], []>} : vector<8x32xf32>, vector<32x96xf32>, vector<8x96xf32> -> vector<8x96xf32>
    %374 = vector.extract_strided_slice %371 {offsets = [0, 0], sizes = [8, 32], strides = [1, 1]} : vector<8x96xf32> to vector<8x32xf32>
    %375 = vector.extract_strided_slice %373 {offsets = [0, 0], sizes = [8, 32], strides = [1, 1]} : vector<8x96xf32> to vector<8x32xf32>
    %376 = arith.addf %374, %375 : vector<8x32xf32>
    %377 = arith.negf %376 : vector<8x32xf32>
    %378 = math.exp %377 : vector<8x32xf32>
    %cst_120 = arith.constant 1.000000e+00 : f32
    %379 = vector.broadcast %cst_120 : f32 to vector<8x32xf32>
    %380 = arith.addf %379, %378 : vector<8x32xf32>
    %381 = arith.divf %379, %380 : vector<8x32xf32>
    %382 = vector.extract_strided_slice %371 {offsets = [0, 32], sizes = [8, 32], strides = [1, 1]} : vector<8x96xf32> to vector<8x32xf32>
    %383 = vector.extract_strided_slice %373 {offsets = [0, 32], sizes = [8, 32], strides = [1, 1]} : vector<8x96xf32> to vector<8x32xf32>
    %384 = arith.addf %382, %383 : vector<8x32xf32>
    %385 = arith.negf %384 : vector<8x32xf32>
    %386 = math.exp %385 : vector<8x32xf32>
    %cst_121 = arith.constant 1.000000e+00 : f32
    %387 = vector.broadcast %cst_121 : f32 to vector<8x32xf32>
    %388 = arith.addf %387, %386 : vector<8x32xf32>
    %389 = arith.divf %387, %388 : vector<8x32xf32>
    %390 = vector.extract_strided_slice %371 {offsets = [0, 64], sizes = [8, 32], strides = [1, 1]} : vector<8x96xf32> to vector<8x32xf32>
    %391 = vector.extract_strided_slice %373 {offsets = [0, 64], sizes = [8, 32], strides = [1, 1]} : vector<8x96xf32> to vector<8x32xf32>
    %392 = vector.broadcast %10 : vector<1x32xf32> to vector<8x32xf32>
    %393 = arith.addf %391, %392 : vector<8x32xf32>
    %394 = arith.mulf %381, %393 : vector<8x32xf32>
    %395 = arith.addf %390, %394 : vector<8x32xf32>
    %396 = math.tanh %395 : vector<8x32xf32>
    %cst_122 = arith.constant 1.000000e+00 : f32
    %397 = vector.broadcast %cst_122 : f32 to vector<8x32xf32>
    %398 = arith.subf %397, %389 : vector<8x32xf32>
    %399 = arith.mulf %398, %396 : vector<8x32xf32>
    %400 = arith.mulf %389, %348 : vector<8x32xf32>
    %401 = arith.addf %399, %400 : vector<8x32xf32>
    %c3_123 = arith.constant 3 : index
    %c0_124 = arith.constant 0 : index
    %c96_125 = arith.constant 96 : index
    %402 = vector.load %arg10[%c3_123, %c0_124, %c96_125] : memref<8x8x192xf32, #tpu.memory_space<vmem>>, vector<1x8x96xf32>
    %403 = vector.shape_cast %402 : vector<1x8x96xf32> to vector<8x96xf32>
    %c0_126 = arith.constant 0 : index
    %c0_127 = arith.constant 0 : index
    %404 = vector.load %arg4[%c0_126, %c0_127] : memref<32x96xf32, #tpu.memory_space<vmem>>, vector<32x96xf32>
    %cst_128 = arith.constant dense<0.000000e+00> : vector<8x96xf32>
    %405 = tpu.matmul %351, %404, %cst_128 {dimension_numbers = #tpu.dot_dimension_numbers<[1], [0], [0], [1], [0, 0, 1, 1], [], []>} : vector<8x32xf32>, vector<32x96xf32>, vector<8x96xf32> -> vector<8x96xf32>
    %406 = vector.extract_strided_slice %403 {offsets = [0, 0], sizes = [8, 32], strides = [1, 1]} : vector<8x96xf32> to vector<8x32xf32>
    %407 = vector.extract_strided_slice %405 {offsets = [0, 0], sizes = [8, 32], strides = [1, 1]} : vector<8x96xf32> to vector<8x32xf32>
    %408 = arith.addf %406, %407 : vector<8x32xf32>
    %409 = arith.negf %408 : vector<8x32xf32>
    %410 = math.exp %409 : vector<8x32xf32>
    %cst_129 = arith.constant 1.000000e+00 : f32
    %411 = vector.broadcast %cst_129 : f32 to vector<8x32xf32>
    %412 = arith.addf %411, %410 : vector<8x32xf32>
    %413 = arith.divf %411, %412 : vector<8x32xf32>
    %414 = vector.extract_strided_slice %403 {offsets = [0, 32], sizes = [8, 32], strides = [1, 1]} : vector<8x96xf32> to vector<8x32xf32>
    %415 = vector.extract_strided_slice %405 {offsets = [0, 32], sizes = [8, 32], strides = [1, 1]} : vector<8x96xf32> to vector<8x32xf32>
    %416 = arith.addf %414, %415 : vector<8x32xf32>
    %417 = arith.negf %416 : vector<8x32xf32>
    %418 = math.exp %417 : vector<8x32xf32>
    %cst_130 = arith.constant 1.000000e+00 : f32
    %419 = vector.broadcast %cst_130 : f32 to vector<8x32xf32>
    %420 = arith.addf %419, %418 : vector<8x32xf32>
    %421 = arith.divf %419, %420 : vector<8x32xf32>
    %422 = vector.extract_strided_slice %403 {offsets = [0, 64], sizes = [8, 32], strides = [1, 1]} : vector<8x96xf32> to vector<8x32xf32>
    %423 = vector.extract_strided_slice %405 {offsets = [0, 64], sizes = [8, 32], strides = [1, 1]} : vector<8x96xf32> to vector<8x32xf32>
    %424 = vector.broadcast %11 : vector<1x32xf32> to vector<8x32xf32>
    %425 = arith.addf %423, %424 : vector<8x32xf32>
    %426 = arith.mulf %413, %425 : vector<8x32xf32>
    %427 = arith.addf %422, %426 : vector<8x32xf32>
    %428 = math.tanh %427 : vector<8x32xf32>
    %cst_131 = arith.constant 1.000000e+00 : f32
    %429 = vector.broadcast %cst_131 : f32 to vector<8x32xf32>
    %430 = arith.subf %429, %421 : vector<8x32xf32>
    %431 = arith.mulf %430, %428 : vector<8x32xf32>
    %432 = arith.mulf %421, %351 : vector<8x32xf32>
    %433 = arith.addf %431, %432 : vector<8x32xf32>
    %434 = vector.shape_cast %367 : vector<8x1xi1> to vector<8x1xi1>
    %435 = vector.broadcast %434 : vector<8x1xi1> to vector<8x32xi1>
    %436 = arith.select %435, %401, %348 : vector<8x32xi1>, vector<8x32xf32>
    %437 = vector.shape_cast %369 : vector<8x1xi1> to vector<8x1xi1>
    %438 = vector.broadcast %437 : vector<8x1xi1> to vector<8x32xi1>
    %439 = arith.select %438, %433, %351 : vector<8x32xi1>, vector<8x32xf32>
    %cst_132 = arith.constant 0.000000e+00 : f32
    %440 = vector.shape_cast %367 : vector<8x1xi1> to vector<8x1xi1>
    %441 = vector.broadcast %440 : vector<8x1xi1> to vector<8x32xi1>
    %442 = vector.broadcast %cst_132 : f32 to vector<8x32xf32>
    %443 = arith.select %441, %401, %442 : vector<8x32xi1>, vector<8x32xf32>
    %c4_133 = arith.constant 4 : index
    %c0_134 = arith.constant 0 : index
    %c0_135 = arith.constant 0 : index
    %444 = vector.load %arg8[%c4_133, %c0_134, %c0_135] : memref<8x8x64xf32, #tpu.memory_space<vmem>>, vector<1x8x32xf32>
    %445 = vector.shape_cast %444 : vector<1x8x32xf32> to vector<8x32xf32>
    %446 = vector.shape_cast %443 : vector<8x32xf32> to vector<1x8x32xf32>
    tpu.vector_store %arg8[%c4_133, %c0_134, %c0_135], %446 {strides = array<i32>} : memref<8x8x64xf32, #tpu.memory_space<vmem>>, vector<1x8x32xf32>,
    %cst_136 = arith.constant 0.000000e+00 : f32
    %447 = vector.shape_cast %369 : vector<8x1xi1> to vector<8x1xi1>
    %448 = vector.broadcast %447 : vector<8x1xi1> to vector<8x32xi1>
    %449 = vector.broadcast %cst_136 : f32 to vector<8x32xf32>
    %450 = arith.select %448, %433, %449 : vector<8x32xi1>, vector<8x32xf32>
    %c3_137 = arith.constant 3 : index
    %c0_138 = arith.constant 0 : index
    %c32_139 = arith.constant 32 : index
    %451 = vector.load %arg8[%c3_137, %c0_138, %c32_139] : memref<8x8x64xf32, #tpu.memory_space<vmem>>, vector<1x8x32xf32>
    %452 = vector.shape_cast %451 : vector<1x8x32xf32> to vector<8x32xf32>
    %453 = vector.shape_cast %450 : vector<8x32xf32> to vector<1x8x32xf32>
    tpu.vector_store %arg8[%c3_137, %c0_138, %c32_139], %453 {strides = array<i32>} : memref<8x8x64xf32, #tpu.memory_space<vmem>>, vector<1x8x32xf32>,
    %c5_i32_140 = arith.constant 5 : i32
    %454 = vector.broadcast %c5_i32_140 : i32 to vector<8x1xi32>
    %455 = arith.cmpi sgt, %9, %454 : vector<8x1xi32>
    %c2_i32_141 = arith.constant 2 : i32
    %456 = vector.broadcast %c2_i32_141 : i32 to vector<8x1xi32>
    %457 = arith.cmpi sgt, %9, %456 : vector<8x1xi32>
    %c5_142 = arith.constant 5 : index
    %c0_143 = arith.constant 0 : index
    %c0_144 = arith.constant 0 : index
    %458 = vector.load %arg10[%c5_142, %c0_143, %c0_144] : memref<8x8x192xf32, #tpu.memory_space<vmem>>, vector<1x8x96xf32>
    %459 = vector.shape_cast %458 : vector<1x8x96xf32> to vector<8x96xf32>
    %c0_145 = arith.constant 0 : index
    %c0_146 = arith.constant 0 : index
    %460 = vector.load %arg3[%c0_145, %c0_146] : memref<32x96xf32, #tpu.memory_space<vmem>>, vector<32x96xf32>
    %cst_147 = arith.constant dense<0.000000e+00> : vector<8x96xf32>
    %461 = tpu.matmul %436, %460, %cst_147 {dimension_numbers = #tpu.dot_dimension_numbers<[1], [0], [0], [1], [0, 0, 1, 1], [], []>} : vector<8x32xf32>, vector<32x96xf32>, vector<8x96xf32> -> vector<8x96xf32>
    %462 = vector.extract_strided_slice %459 {offsets = [0, 0], sizes = [8, 32], strides = [1, 1]} : vector<8x96xf32> to vector<8x32xf32>
    %463 = vector.extract_strided_slice %461 {offsets = [0, 0], sizes = [8, 32], strides = [1, 1]} : vector<8x96xf32> to vector<8x32xf32>
    %464 = arith.addf %462, %463 : vector<8x32xf32>
    %465 = arith.negf %464 : vector<8x32xf32>
    %466 = math.exp %465 : vector<8x32xf32>
    %cst_148 = arith.constant 1.000000e+00 : f32
    %467 = vector.broadcast %cst_148 : f32 to vector<8x32xf32>
    %468 = arith.addf %467, %466 : vector<8x32xf32>
    %469 = arith.divf %467, %468 : vector<8x32xf32>
    %470 = vector.extract_strided_slice %459 {offsets = [0, 32], sizes = [8, 32], strides = [1, 1]} : vector<8x96xf32> to vector<8x32xf32>
    %471 = vector.extract_strided_slice %461 {offsets = [0, 32], sizes = [8, 32], strides = [1, 1]} : vector<8x96xf32> to vector<8x32xf32>
    %472 = arith.addf %470, %471 : vector<8x32xf32>
    %473 = arith.negf %472 : vector<8x32xf32>
    %474 = math.exp %473 : vector<8x32xf32>
    %cst_149 = arith.constant 1.000000e+00 : f32
    %475 = vector.broadcast %cst_149 : f32 to vector<8x32xf32>
    %476 = arith.addf %475, %474 : vector<8x32xf32>
    %477 = arith.divf %475, %476 : vector<8x32xf32>
    %478 = vector.extract_strided_slice %459 {offsets = [0, 64], sizes = [8, 32], strides = [1, 1]} : vector<8x96xf32> to vector<8x32xf32>
    %479 = vector.extract_strided_slice %461 {offsets = [0, 64], sizes = [8, 32], strides = [1, 1]} : vector<8x96xf32> to vector<8x32xf32>
    %480 = vector.broadcast %10 : vector<1x32xf32> to vector<8x32xf32>
    %481 = arith.addf %479, %480 : vector<8x32xf32>
    %482 = arith.mulf %469, %481 : vector<8x32xf32>
    %483 = arith.addf %478, %482 : vector<8x32xf32>
    %484 = math.tanh %483 : vector<8x32xf32>
    %cst_150 = arith.constant 1.000000e+00 : f32
    %485 = vector.broadcast %cst_150 : f32 to vector<8x32xf32>
    %486 = arith.subf %485, %477 : vector<8x32xf32>
    %487 = arith.mulf %486, %484 : vector<8x32xf32>
    %488 = arith.mulf %477, %436 : vector<8x32xf32>
    %489 = arith.addf %487, %488 : vector<8x32xf32>
    %c2_151 = arith.constant 2 : index
    %c0_152 = arith.constant 0 : index
    %c96_153 = arith.constant 96 : index
    %490 = vector.load %arg10[%c2_151, %c0_152, %c96_153] : memref<8x8x192xf32, #tpu.memory_space<vmem>>, vector<1x8x96xf32>
    %491 = vector.shape_cast %490 : vector<1x8x96xf32> to vector<8x96xf32>
    %c0_154 = arith.constant 0 : index
    %c0_155 = arith.constant 0 : index
    %492 = vector.load %arg4[%c0_154, %c0_155] : memref<32x96xf32, #tpu.memory_space<vmem>>, vector<32x96xf32>
    %cst_156 = arith.constant dense<0.000000e+00> : vector<8x96xf32>
    %493 = tpu.matmul %439, %492, %cst_156 {dimension_numbers = #tpu.dot_dimension_numbers<[1], [0], [0], [1], [0, 0, 1, 1], [], []>} : vector<8x32xf32>, vector<32x96xf32>, vector<8x96xf32> -> vector<8x96xf32>
    %494 = vector.extract_strided_slice %491 {offsets = [0, 0], sizes = [8, 32], strides = [1, 1]} : vector<8x96xf32> to vector<8x32xf32>
    %495 = vector.extract_strided_slice %493 {offsets = [0, 0], sizes = [8, 32], strides = [1, 1]} : vector<8x96xf32> to vector<8x32xf32>
    %496 = arith.addf %494, %495 : vector<8x32xf32>
    %497 = arith.negf %496 : vector<8x32xf32>
    %498 = math.exp %497 : vector<8x32xf32>
    %cst_157 = arith.constant 1.000000e+00 : f32
    %499 = vector.broadcast %cst_157 : f32 to vector<8x32xf32>
    %500 = arith.addf %499, %498 : vector<8x32xf32>
    %501 = arith.divf %499, %500 : vector<8x32xf32>
    %502 = vector.extract_strided_slice %491 {offsets = [0, 32], sizes = [8, 32], strides = [1, 1]} : vector<8x96xf32> to vector<8x32xf32>
    %503 = vector.extract_strided_slice %493 {offsets = [0, 32], sizes = [8, 32], strides = [1, 1]} : vector<8x96xf32> to vector<8x32xf32>
    %504 = arith.addf %502, %503 : vector<8x32xf32>
    %505 = arith.negf %504 : vector<8x32xf32>
    %506 = math.exp %505 : vector<8x32xf32>
    %cst_158 = arith.constant 1.000000e+00 : f32
    %507 = vector.broadcast %cst_158 : f32 to vector<8x32xf32>
    %508 = arith.addf %507, %506 : vector<8x32xf32>
    %509 = arith.divf %507, %508 : vector<8x32xf32>
    %510 = vector.extract_strided_slice %491 {offsets = [0, 64], sizes = [8, 32], strides = [1, 1]} : vector<8x96xf32> to vector<8x32xf32>
    %511 = vector.extract_strided_slice %493 {offsets = [0, 64], sizes = [8, 32], strides = [1, 1]} : vector<8x96xf32> to vector<8x32xf32>
    %512 = vector.broadcast %11 : vector<1x32xf32> to vector<8x32xf32>
    %513 = arith.addf %511, %512 : vector<8x32xf32>
    %514 = arith.mulf %501, %513 : vector<8x32xf32>
    %515 = arith.addf %510, %514 : vector<8x32xf32>
    %516 = math.tanh %515 : vector<8x32xf32>
    %cst_159 = arith.constant 1.000000e+00 : f32
    %517 = vector.broadcast %cst_159 : f32 to vector<8x32xf32>
    %518 = arith.subf %517, %509 : vector<8x32xf32>
    %519 = arith.mulf %518, %516 : vector<8x32xf32>
    %520 = arith.mulf %509, %439 : vector<8x32xf32>
    %521 = arith.addf %519, %520 : vector<8x32xf32>
    %522 = vector.shape_cast %455 : vector<8x1xi1> to vector<8x1xi1>
    %523 = vector.broadcast %522 : vector<8x1xi1> to vector<8x32xi1>
    %524 = arith.select %523, %489, %436 : vector<8x32xi1>, vector<8x32xf32>
    %525 = vector.shape_cast %457 : vector<8x1xi1> to vector<8x1xi1>
    %526 = vector.broadcast %525 : vector<8x1xi1> to vector<8x32xi1>
    %527 = arith.select %526, %521, %439 : vector<8x32xi1>, vector<8x32xf32>
    %cst_160 = arith.constant 0.000000e+00 : f32
    %528 = vector.shape_cast %455 : vector<8x1xi1> to vector<8x1xi1>
    %529 = vector.broadcast %528 : vector<8x1xi1> to vector<8x32xi1>
    %530 = vector.broadcast %cst_160 : f32 to vector<8x32xf32>
    %531 = arith.select %529, %489, %530 : vector<8x32xi1>, vector<8x32xf32>
    %c5_161 = arith.constant 5 : index
    %c0_162 = arith.constant 0 : index
    %c0_163 = arith.constant 0 : index
    %532 = vector.load %arg8[%c5_161, %c0_162, %c0_163] : memref<8x8x64xf32, #tpu.memory_space<vmem>>, vector<1x8x32xf32>
    %533 = vector.shape_cast %532 : vector<1x8x32xf32> to vector<8x32xf32>
    %534 = vector.shape_cast %531 : vector<8x32xf32> to vector<1x8x32xf32>
    tpu.vector_store %arg8[%c5_161, %c0_162, %c0_163], %534 {strides = array<i32>} : memref<8x8x64xf32, #tpu.memory_space<vmem>>, vector<1x8x32xf32>,
    %cst_164 = arith.constant 0.000000e+00 : f32
    %535 = vector.shape_cast %457 : vector<8x1xi1> to vector<8x1xi1>
    %536 = vector.broadcast %535 : vector<8x1xi1> to vector<8x32xi1>
    %537 = vector.broadcast %cst_164 : f32 to vector<8x32xf32>
    %538 = arith.select %536, %521, %537 : vector<8x32xi1>, vector<8x32xf32>
    %c2_165 = arith.constant 2 : index
    %c0_166 = arith.constant 0 : index
    %c32_167 = arith.constant 32 : index
    %539 = vector.load %arg8[%c2_165, %c0_166, %c32_167] : memref<8x8x64xf32, #tpu.memory_space<vmem>>, vector<1x8x32xf32>
    %540 = vector.shape_cast %539 : vector<1x8x32xf32> to vector<8x32xf32>
    %541 = vector.shape_cast %538 : vector<8x32xf32> to vector<1x8x32xf32>
    tpu.vector_store %arg8[%c2_165, %c0_166, %c32_167], %541 {strides = array<i32>} : memref<8x8x64xf32, #tpu.memory_space<vmem>>, vector<1x8x32xf32>,
    %c6_i32_168 = arith.constant 6 : i32
    %542 = vector.broadcast %c6_i32_168 : i32 to vector<8x1xi32>
    %543 = arith.cmpi sgt, %9, %542 : vector<8x1xi32>
    %c1_i32_169 = arith.constant 1 : i32
    %544 = vector.broadcast %c1_i32_169 : i32 to vector<8x1xi32>
    %545 = arith.cmpi sgt, %9, %544 : vector<8x1xi32>
    %c6_170 = arith.constant 6 : index
    %c0_171 = arith.constant 0 : index
    %c0_172 = arith.constant 0 : index
    %546 = vector.load %arg10[%c6_170, %c0_171, %c0_172] : memref<8x8x192xf32, #tpu.memory_space<vmem>>, vector<1x8x96xf32>
    %547 = vector.shape_cast %546 : vector<1x8x96xf32> to vector<8x96xf32>
    %c0_173 = arith.constant 0 : index
    %c0_174 = arith.constant 0 : index
    %548 = vector.load %arg3[%c0_173, %c0_174] : memref<32x96xf32, #tpu.memory_space<vmem>>, vector<32x96xf32>
    %cst_175 = arith.constant dense<0.000000e+00> : vector<8x96xf32>
    %549 = tpu.matmul %524, %548, %cst_175 {dimension_numbers = #tpu.dot_dimension_numbers<[1], [0], [0], [1], [0, 0, 1, 1], [], []>} : vector<8x32xf32>, vector<32x96xf32>, vector<8x96xf32> -> vector<8x96xf32>
    %550 = vector.extract_strided_slice %547 {offsets = [0, 0], sizes = [8, 32], strides = [1, 1]} : vector<8x96xf32> to vector<8x32xf32>
    %551 = vector.extract_strided_slice %549 {offsets = [0, 0], sizes = [8, 32], strides = [1, 1]} : vector<8x96xf32> to vector<8x32xf32>
    %552 = arith.addf %550, %551 : vector<8x32xf32>
    %553 = arith.negf %552 : vector<8x32xf32>
    %554 = math.exp %553 : vector<8x32xf32>
    %cst_176 = arith.constant 1.000000e+00 : f32
    %555 = vector.broadcast %cst_176 : f32 to vector<8x32xf32>
    %556 = arith.addf %555, %554 : vector<8x32xf32>
    %557 = arith.divf %555, %556 : vector<8x32xf32>
    %558 = vector.extract_strided_slice %547 {offsets = [0, 32], sizes = [8, 32], strides = [1, 1]} : vector<8x96xf32> to vector<8x32xf32>
    %559 = vector.extract_strided_slice %549 {offsets = [0, 32], sizes = [8, 32], strides = [1, 1]} : vector<8x96xf32> to vector<8x32xf32>
    %560 = arith.addf %558, %559 : vector<8x32xf32>
    %561 = arith.negf %560 : vector<8x32xf32>
    %562 = math.exp %561 : vector<8x32xf32>
    %cst_177 = arith.constant 1.000000e+00 : f32
    %563 = vector.broadcast %cst_177 : f32 to vector<8x32xf32>
    %564 = arith.addf %563, %562 : vector<8x32xf32>
    %565 = arith.divf %563, %564 : vector<8x32xf32>
    %566 = vector.extract_strided_slice %547 {offsets = [0, 64], sizes = [8, 32], strides = [1, 1]} : vector<8x96xf32> to vector<8x32xf32>
    %567 = vector.extract_strided_slice %549 {offsets = [0, 64], sizes = [8, 32], strides = [1, 1]} : vector<8x96xf32> to vector<8x32xf32>
    %568 = vector.broadcast %10 : vector<1x32xf32> to vector<8x32xf32>
    %569 = arith.addf %567, %568 : vector<8x32xf32>
    %570 = arith.mulf %557, %569 : vector<8x32xf32>
    %571 = arith.addf %566, %570 : vector<8x32xf32>
    %572 = math.tanh %571 : vector<8x32xf32>
    %cst_178 = arith.constant 1.000000e+00 : f32
    %573 = vector.broadcast %cst_178 : f32 to vector<8x32xf32>
    %574 = arith.subf %573, %565 : vector<8x32xf32>
    %575 = arith.mulf %574, %572 : vector<8x32xf32>
    %576 = arith.mulf %565, %524 : vector<8x32xf32>
    %577 = arith.addf %575, %576 : vector<8x32xf32>
    %c1_179 = arith.constant 1 : index
    %c0_180 = arith.constant 0 : index
    %c96_181 = arith.constant 96 : index
    %578 = vector.load %arg10[%c1_179, %c0_180, %c96_181] : memref<8x8x192xf32, #tpu.memory_space<vmem>>, vector<1x8x96xf32>
    %579 = vector.shape_cast %578 : vector<1x8x96xf32> to vector<8x96xf32>
    %c0_182 = arith.constant 0 : index
    %c0_183 = arith.constant 0 : index
    %580 = vector.load %arg4[%c0_182, %c0_183] : memref<32x96xf32, #tpu.memory_space<vmem>>, vector<32x96xf32>
    %cst_184 = arith.constant dense<0.000000e+00> : vector<8x96xf32>
    %581 = tpu.matmul %527, %580, %cst_184 {dimension_numbers = #tpu.dot_dimension_numbers<[1], [0], [0], [1], [0, 0, 1, 1], [], []>} : vector<8x32xf32>, vector<32x96xf32>, vector<8x96xf32> -> vector<8x96xf32>
    %582 = vector.extract_strided_slice %579 {offsets = [0, 0], sizes = [8, 32], strides = [1, 1]} : vector<8x96xf32> to vector<8x32xf32>
    %583 = vector.extract_strided_slice %581 {offsets = [0, 0], sizes = [8, 32], strides = [1, 1]} : vector<8x96xf32> to vector<8x32xf32>
    %584 = arith.addf %582, %583 : vector<8x32xf32>
    %585 = arith.negf %584 : vector<8x32xf32>
    %586 = math.exp %585 : vector<8x32xf32>
    %cst_185 = arith.constant 1.000000e+00 : f32
    %587 = vector.broadcast %cst_185 : f32 to vector<8x32xf32>
    %588 = arith.addf %587, %586 : vector<8x32xf32>
    %589 = arith.divf %587, %588 : vector<8x32xf32>
    %590 = vector.extract_strided_slice %579 {offsets = [0, 32], sizes = [8, 32], strides = [1, 1]} : vector<8x96xf32> to vector<8x32xf32>
    %591 = vector.extract_strided_slice %581 {offsets = [0, 32], sizes = [8, 32], strides = [1, 1]} : vector<8x96xf32> to vector<8x32xf32>
    %592 = arith.addf %590, %591 : vector<8x32xf32>
    %593 = arith.negf %592 : vector<8x32xf32>
    %594 = math.exp %593 : vector<8x32xf32>
    %cst_186 = arith.constant 1.000000e+00 : f32
    %595 = vector.broadcast %cst_186 : f32 to vector<8x32xf32>
    %596 = arith.addf %595, %594 : vector<8x32xf32>
    %597 = arith.divf %595, %596 : vector<8x32xf32>
    %598 = vector.extract_strided_slice %579 {offsets = [0, 64], sizes = [8, 32], strides = [1, 1]} : vector<8x96xf32> to vector<8x32xf32>
    %599 = vector.extract_strided_slice %581 {offsets = [0, 64], sizes = [8, 32], strides = [1, 1]} : vector<8x96xf32> to vector<8x32xf32>
    %600 = vector.broadcast %11 : vector<1x32xf32> to vector<8x32xf32>
    %601 = arith.addf %599, %600 : vector<8x32xf32>
    %602 = arith.mulf %589, %601 : vector<8x32xf32>
    %603 = arith.addf %598, %602 : vector<8x32xf32>
    %604 = math.tanh %603 : vector<8x32xf32>
    %cst_187 = arith.constant 1.000000e+00 : f32
    %605 = vector.broadcast %cst_187 : f32 to vector<8x32xf32>
    %606 = arith.subf %605, %597 : vector<8x32xf32>
    %607 = arith.mulf %606, %604 : vector<8x32xf32>
    %608 = arith.mulf %597, %527 : vector<8x32xf32>
    %609 = arith.addf %607, %608 : vector<8x32xf32>
    %610 = vector.shape_cast %543 : vector<8x1xi1> to vector<8x1xi1>
    %611 = vector.broadcast %610 : vector<8x1xi1> to vector<8x32xi1>
    %612 = arith.select %611, %577, %524 : vector<8x32xi1>, vector<8x32xf32>
    %613 = vector.shape_cast %545 : vector<8x1xi1> to vector<8x1xi1>
    %614 = vector.broadcast %613 : vector<8x1xi1> to vector<8x32xi1>
    %615 = arith.select %614, %609, %527 : vector<8x32xi1>, vector<8x32xf32>
    %cst_188 = arith.constant 0.000000e+00 : f32
    %616 = vector.shape_cast %543 : vector<8x1xi1> to vector<8x1xi1>
    %617 = vector.broadcast %616 : vector<8x1xi1> to vector<8x32xi1>
    %618 = vector.broadcast %cst_188 : f32 to vector<8x32xf32>
    %619 = arith.select %617, %577, %618 : vector<8x32xi1>, vector<8x32xf32>
    %c6_189 = arith.constant 6 : index
    %c0_190 = arith.constant 0 : index
    %c0_191 = arith.constant 0 : index
    %620 = vector.load %arg8[%c6_189, %c0_190, %c0_191] : memref<8x8x64xf32, #tpu.memory_space<vmem>>, vector<1x8x32xf32>
    %621 = vector.shape_cast %620 : vector<1x8x32xf32> to vector<8x32xf32>
    %622 = vector.shape_cast %619 : vector<8x32xf32> to vector<1x8x32xf32>
    tpu.vector_store %arg8[%c6_189, %c0_190, %c0_191], %622 {strides = array<i32>} : memref<8x8x64xf32, #tpu.memory_space<vmem>>, vector<1x8x32xf32>,
    %cst_192 = arith.constant 0.000000e+00 : f32
    %623 = vector.shape_cast %545 : vector<8x1xi1> to vector<8x1xi1>
    %624 = vector.broadcast %623 : vector<8x1xi1> to vector<8x32xi1>
    %625 = vector.broadcast %cst_192 : f32 to vector<8x32xf32>
    %626 = arith.select %624, %609, %625 : vector<8x32xi1>, vector<8x32xf32>
    %c1_193 = arith.constant 1 : index
    %c0_194 = arith.constant 0 : index
    %c32_195 = arith.constant 32 : index
    %627 = vector.load %arg8[%c1_193, %c0_194, %c32_195] : memref<8x8x64xf32, #tpu.memory_space<vmem>>, vector<1x8x32xf32>
    %628 = vector.shape_cast %627 : vector<1x8x32xf32> to vector<8x32xf32>
    %629 = vector.shape_cast %626 : vector<8x32xf32> to vector<1x8x32xf32>
    tpu.vector_store %arg8[%c1_193, %c0_194, %c32_195], %629 {strides = array<i32>} : memref<8x8x64xf32, #tpu.memory_space<vmem>>, vector<1x8x32xf32>,
    %c7_i32_196 = arith.constant 7 : i32
    %630 = vector.broadcast %c7_i32_196 : i32 to vector<8x1xi32>
    %631 = arith.cmpi sgt, %9, %630 : vector<8x1xi32>
    %c0_i32_197 = arith.constant 0 : i32
    %632 = vector.broadcast %c0_i32_197 : i32 to vector<8x1xi32>
    %633 = arith.cmpi sgt, %9, %632 : vector<8x1xi32>
    %c7_198 = arith.constant 7 : index
    %c0_199 = arith.constant 0 : index
    %c0_200 = arith.constant 0 : index
    %634 = vector.load %arg10[%c7_198, %c0_199, %c0_200] : memref<8x8x192xf32, #tpu.memory_space<vmem>>, vector<1x8x96xf32>
    %635 = vector.shape_cast %634 : vector<1x8x96xf32> to vector<8x96xf32>
    %c0_201 = arith.constant 0 : index
    %c0_202 = arith.constant 0 : index
    %636 = vector.load %arg3[%c0_201, %c0_202] : memref<32x96xf32, #tpu.memory_space<vmem>>, vector<32x96xf32>
    %cst_203 = arith.constant dense<0.000000e+00> : vector<8x96xf32>
    %637 = tpu.matmul %612, %636, %cst_203 {dimension_numbers = #tpu.dot_dimension_numbers<[1], [0], [0], [1], [0, 0, 1, 1], [], []>} : vector<8x32xf32>, vector<32x96xf32>, vector<8x96xf32> -> vector<8x96xf32>
    %638 = vector.extract_strided_slice %635 {offsets = [0, 0], sizes = [8, 32], strides = [1, 1]} : vector<8x96xf32> to vector<8x32xf32>
    %639 = vector.extract_strided_slice %637 {offsets = [0, 0], sizes = [8, 32], strides = [1, 1]} : vector<8x96xf32> to vector<8x32xf32>
    %640 = arith.addf %638, %639 : vector<8x32xf32>
    %641 = arith.negf %640 : vector<8x32xf32>
    %642 = math.exp %641 : vector<8x32xf32>
    %cst_204 = arith.constant 1.000000e+00 : f32
    %643 = vector.broadcast %cst_204 : f32 to vector<8x32xf32>
    %644 = arith.addf %643, %642 : vector<8x32xf32>
    %645 = arith.divf %643, %644 : vector<8x32xf32>
    %646 = vector.extract_strided_slice %635 {offsets = [0, 32], sizes = [8, 32], strides = [1, 1]} : vector<8x96xf32> to vector<8x32xf32>
    %647 = vector.extract_strided_slice %637 {offsets = [0, 32], sizes = [8, 32], strides = [1, 1]} : vector<8x96xf32> to vector<8x32xf32>
    %648 = arith.addf %646, %647 : vector<8x32xf32>
    %649 = arith.negf %648 : vector<8x32xf32>
    %650 = math.exp %649 : vector<8x32xf32>
    %cst_205 = arith.constant 1.000000e+00 : f32
    %651 = vector.broadcast %cst_205 : f32 to vector<8x32xf32>
    %652 = arith.addf %651, %650 : vector<8x32xf32>
    %653 = arith.divf %651, %652 : vector<8x32xf32>
    %654 = vector.extract_strided_slice %635 {offsets = [0, 64], sizes = [8, 32], strides = [1, 1]} : vector<8x96xf32> to vector<8x32xf32>
    %655 = vector.extract_strided_slice %637 {offsets = [0, 64], sizes = [8, 32], strides = [1, 1]} : vector<8x96xf32> to vector<8x32xf32>
    %656 = vector.broadcast %10 : vector<1x32xf32> to vector<8x32xf32>
    %657 = arith.addf %655, %656 : vector<8x32xf32>
    %658 = arith.mulf %645, %657 : vector<8x32xf32>
    %659 = arith.addf %654, %658 : vector<8x32xf32>
    %660 = math.tanh %659 : vector<8x32xf32>
    %cst_206 = arith.constant 1.000000e+00 : f32
    %661 = vector.broadcast %cst_206 : f32 to vector<8x32xf32>
    %662 = arith.subf %661, %653 : vector<8x32xf32>
    %663 = arith.mulf %662, %660 : vector<8x32xf32>
    %664 = arith.mulf %653, %612 : vector<8x32xf32>
    %665 = arith.addf %663, %664 : vector<8x32xf32>
    %c0_207 = arith.constant 0 : index
    %c0_208 = arith.constant 0 : index
    %c96_209 = arith.constant 96 : index
    %666 = vector.load %arg10[%c0_207, %c0_208, %c96_209] : memref<8x8x192xf32, #tpu.memory_space<vmem>>, vector<1x8x96xf32>
    %667 = vector.shape_cast %666 : vector<1x8x96xf32> to vector<8x96xf32>
    %c0_210 = arith.constant 0 : index
    %c0_211 = arith.constant 0 : index
    %668 = vector.load %arg4[%c0_210, %c0_211] : memref<32x96xf32, #tpu.memory_space<vmem>>, vector<32x96xf32>
    %cst_212 = arith.constant dense<0.000000e+00> : vector<8x96xf32>
    %669 = tpu.matmul %615, %668, %cst_212 {dimension_numbers = #tpu.dot_dimension_numbers<[1], [0], [0], [1], [0, 0, 1, 1], [], []>} : vector<8x32xf32>, vector<32x96xf32>, vector<8x96xf32> -> vector<8x96xf32>
    %670 = vector.extract_strided_slice %667 {offsets = [0, 0], sizes = [8, 32], strides = [1, 1]} : vector<8x96xf32> to vector<8x32xf32>
    %671 = vector.extract_strided_slice %669 {offsets = [0, 0], sizes = [8, 32], strides = [1, 1]} : vector<8x96xf32> to vector<8x32xf32>
    %672 = arith.addf %670, %671 : vector<8x32xf32>
    %673 = arith.negf %672 : vector<8x32xf32>
    %674 = math.exp %673 : vector<8x32xf32>
    %cst_213 = arith.constant 1.000000e+00 : f32
    %675 = vector.broadcast %cst_213 : f32 to vector<8x32xf32>
    %676 = arith.addf %675, %674 : vector<8x32xf32>
    %677 = arith.divf %675, %676 : vector<8x32xf32>
    %678 = vector.extract_strided_slice %667 {offsets = [0, 32], sizes = [8, 32], strides = [1, 1]} : vector<8x96xf32> to vector<8x32xf32>
    %679 = vector.extract_strided_slice %669 {offsets = [0, 32], sizes = [8, 32], strides = [1, 1]} : vector<8x96xf32> to vector<8x32xf32>
    %680 = arith.addf %678, %679 : vector<8x32xf32>
    %681 = arith.negf %680 : vector<8x32xf32>
    %682 = math.exp %681 : vector<8x32xf32>
    %cst_214 = arith.constant 1.000000e+00 : f32
    %683 = vector.broadcast %cst_214 : f32 to vector<8x32xf32>
    %684 = arith.addf %683, %682 : vector<8x32xf32>
    %685 = arith.divf %683, %684 : vector<8x32xf32>
    %686 = vector.extract_strided_slice %667 {offsets = [0, 64], sizes = [8, 32], strides = [1, 1]} : vector<8x96xf32> to vector<8x32xf32>
    %687 = vector.extract_strided_slice %669 {offsets = [0, 64], sizes = [8, 32], strides = [1, 1]} : vector<8x96xf32> to vector<8x32xf32>
    %688 = vector.broadcast %11 : vector<1x32xf32> to vector<8x32xf32>
    %689 = arith.addf %687, %688 : vector<8x32xf32>
    %690 = arith.mulf %677, %689 : vector<8x32xf32>
    %691 = arith.addf %686, %690 : vector<8x32xf32>
    %692 = math.tanh %691 : vector<8x32xf32>
    %cst_215 = arith.constant 1.000000e+00 : f32
    %693 = vector.broadcast %cst_215 : f32 to vector<8x32xf32>
    %694 = arith.subf %693, %685 : vector<8x32xf32>
    %695 = arith.mulf %694, %692 : vector<8x32xf32>
    %696 = arith.mulf %685, %615 : vector<8x32xf32>
    %697 = arith.addf %695, %696 : vector<8x32xf32>
    %698 = vector.shape_cast %631 : vector<8x1xi1> to vector<8x1xi1>
    %699 = vector.broadcast %698 : vector<8x1xi1> to vector<8x32xi1>
    %700 = arith.select %699, %665, %612 : vector<8x32xi1>, vector<8x32xf32>
    %701 = vector.shape_cast %633 : vector<8x1xi1> to vector<8x1xi1>
    %702 = vector.broadcast %701 : vector<8x1xi1> to vector<8x32xi1>
    %703 = arith.select %702, %697, %615 : vector<8x32xi1>, vector<8x32xf32>
    %cst_216 = arith.constant 0.000000e+00 : f32
    %704 = vector.shape_cast %631 : vector<8x1xi1> to vector<8x1xi1>
    %705 = vector.broadcast %704 : vector<8x1xi1> to vector<8x32xi1>
    %706 = vector.broadcast %cst_216 : f32 to vector<8x32xf32>
    %707 = arith.select %705, %665, %706 : vector<8x32xi1>, vector<8x32xf32>
    %c7_217 = arith.constant 7 : index
    %c0_218 = arith.constant 0 : index
    %c0_219 = arith.constant 0 : index
    %708 = vector.load %arg8[%c7_217, %c0_218, %c0_219] : memref<8x8x64xf32, #tpu.memory_space<vmem>>, vector<1x8x32xf32>
    %709 = vector.shape_cast %708 : vector<1x8x32xf32> to vector<8x32xf32>
    %710 = vector.shape_cast %707 : vector<8x32xf32> to vector<1x8x32xf32>
    tpu.vector_store %arg8[%c7_217, %c0_218, %c0_219], %710 {strides = array<i32>} : memref<8x8x64xf32, #tpu.memory_space<vmem>>, vector<1x8x32xf32>,
    %cst_220 = arith.constant 0.000000e+00 : f32
    %711 = vector.shape_cast %633 : vector<8x1xi1> to vector<8x1xi1>
    %712 = vector.broadcast %711 : vector<8x1xi1> to vector<8x32xi1>
    %713 = vector.broadcast %cst_220 : f32 to vector<8x32xf32>
    %714 = arith.select %712, %697, %713 : vector<8x32xi1>, vector<8x32xf32>
    %c0_221 = arith.constant 0 : index
    %c0_222 = arith.constant 0 : index
    %c32_223 = arith.constant 32 : index
    %715 = vector.load %arg8[%c0_221, %c0_222, %c32_223] : memref<8x8x64xf32, #tpu.memory_space<vmem>>, vector<1x8x32xf32>
    %716 = vector.shape_cast %715 : vector<1x8x32xf32> to vector<8x32xf32>
    %717 = vector.shape_cast %714 : vector<8x32xf32> to vector<1x8x32xf32>
    tpu.vector_store %arg8[%c0_221, %c0_222, %c32_223], %717 {strides = array<i32>} : memref<8x8x64xf32, #tpu.memory_space<vmem>>, vector<1x8x32xf32>,
    %c0_224 = arith.constant 0 : index
    %c0_225 = arith.constant 0 : index
    %718 = vector.load %arg9[%c0_224, %c0_225] : memref<8x64xf32, #tpu.memory_space<vmem>>, vector<8x32xf32>
    tpu.vector_store %arg9[%c0_224, %c0_225], %700 {strides = array<i32>} : memref<8x64xf32, #tpu.memory_space<vmem>>, vector<8x32xf32>,
    %c0_226 = arith.constant 0 : index
    %c32_227 = arith.constant 32 : index
    %719 = vector.load %arg9[%c0_226, %c32_227] : memref<8x64xf32, #tpu.memory_space<vmem>>, vector<8x32xf32>
    tpu.vector_store %arg9[%c0_226, %c32_227], %703 {strides = array<i32>} : memref<8x64xf32, #tpu.memory_space<vmem>>, vector<8x32xf32>,
    return
  }
}

</mosaic_0001>

<llo_original>
// kernel: _lambda_.1
$region0: #{_lambda_.1}
  #allocation0 [shape = 'u32[]', space=smem, size = 0x4, offset = 0x4, fixed_abs, tag = 'smem constant byte address 0x4 - core index']
  #allocation1 [shape = 'u32[72,128]{1,0:T(1,128)}', space=vmem, size = 0x9000, scoped, tag = 'internal scratch']
  #allocation2 [shape = 'f32[8,8,192]{2,1,0:T(8,128)}', space=vmem, size = 0x10000, scoped, tag = 'scratch operand']
  %s0 = inlined_call_operand.vmem [shape: f32[8,8,32], index: 0, kind: input, shape index: {}]
  %s1 = inlined_call_operand.vmem [shape: s32[8,1], index: 1, kind: input, shape index: {}]
  %s2 = inlined_call_operand.vmem [shape: f32[32,192], index: 2, kind: input, shape index: {}]
  %s3 = inlined_call_operand.vmem [shape: f32[32,96], index: 3, kind: input, shape index: {}]
  %s4 = inlined_call_operand.vmem [shape: f32[32,96], index: 4, kind: input, shape index: {}]
  %s5 = inlined_call_operand.vmem [shape: f32[1,192], index: 5, kind: input, shape index: {}]
  %s6 = inlined_call_operand.vmem [shape: f32[1,32], index: 6, kind: input, shape index: {}]
  %s7 = inlined_call_operand.vmem [shape: f32[1,32], index: 7, kind: input, shape index: {}]
  %s8 = inlined_call_operand.vmem [shape: f32[8,8,64], index: 8, kind: output, shape index: {0}]
  %s9 = inlined_call_operand.hbm [shape: f32[8,64], index: 9, kind: output, shape index: {1}]
  %10 = xla_tuple %s8, %s9
  %s11 = sld [smem:[#allocation0]]
  $region50: #{_lambda_.1} parent=0
    _
  %s13 = ssub.s32 1, %s11
  %s14 = scalar_select 0, %s13, %s11
  $region1: #{_lambda_.1} parent=0
    #allocation3 [shape = 'u8[4096]{0}', space=vmem, size = 0x1000, scoped, tag = 'output window, operand 1, single buffered']
    #allocation4 [shape = 's32[1]{0}', space=sflag, size = 0x4, scoped, tag = 'scoped memory for _lambda_.1']
    %15 = vsyncpa [#allocation4], 0
    // Predicated region
    $region2: #{_lambda_.1} parent=1 // pred_check
      _
    $region3: #{_lambda_.1} parent=1 // pred_check_branch
      %17 = sbr.rel (0) target = $region5
    $region4: #{_lambda_.1} parent=1 // pred_region
      _
    $region5: #{_lambda_.1} parent=1 // pred_fallthru
      _
    // Predicated region
    $region6: #{_lambda_.1} parent=1 // pred_check
      _
    $region7: #{_lambda_.1} parent=1 // pred_check_branch
      %19 = sbr.rel (0) target = $region9
    $region8: #{_lambda_.1} parent=1 // pred_region
      _
    $region9: #{_lambda_.1} parent=1 // pred_fallthru
      _
    // Predicated region
    $region10: #{_lambda_.1} parent=1 // pred_check
      _
    $region11: #{_lambda_.1} parent=1 // pred_check_branch
      %21 = sbr.rel (0) target = $region13
    $region12: #{_lambda_.1} parent=1 // pred_region
      _
    $region13: #{_lambda_.1} parent=1 // pred_fallthru
      _
    // Predicated region
    $region14: #{_lambda_.1} parent=1 // pred_check
      _
    $region15: #{_lambda_.1} parent=1 // pred_check_branch
      %23 = sbr.rel (0) target = $region17
    $region16: #{_lambda_.1} parent=1 // pred_region
      _
    $region17: #{_lambda_.1} parent=1 // pred_fallthru
      _
    // Predicated region
    $region18: #{_lambda_.1} parent=1 // pred_check
      _
    $region19: #{_lambda_.1} parent=1 // pred_check_branch
      %25 = sbr.rel (0) target = $region21
    $region20: #{_lambda_.1} parent=1 // pred_region
      _
    $region21: #{_lambda_.1} parent=1 // pred_fallthru
      _
    // Predicated region
    $region22: #{_lambda_.1} parent=1 // pred_check
      _
    $region23: #{_lambda_.1} parent=1 // pred_check_branch
      %27 = sbr.rel (0) target = $region25
    $region24: #{_lambda_.1} parent=1 // pred_region
      _
    $region25: #{_lambda_.1} parent=1 // pred_fallthru
      _
    // Predicated region
    $region26: #{_lambda_.1} parent=1 // pred_check
      _
    $region27: #{_lambda_.1} parent=1 // pred_check_branch
      %29 = sbr.rel (0) target = $region29
    $region28: #{_lambda_.1} parent=1 // pred_region
      _
    $region29: #{_lambda_.1} parent=1 // pred_fallthru
      _
    // Predicated region
    $region30: #{_lambda_.1} parent=1 // pred_check
      _
    $region31: #{_lambda_.1} parent=1 // pred_check_branch
      %31 = sbr.rel (0) target = $region33
    $region32: #{_lambda_.1} parent=1 // pred_region
      _
    $region33: #{_lambda_.1} parent=1 // pred_fallthru
      _
    %v32 = vld [vmem:[%s0] sm:$0xff]
    %v33 = vld [vmem:[%s0 + $0x8] sm:$0xff]
    %v34 = vld [vmem:[%s0 + $0x10] sm:$0xff]
    %v35 = vld [vmem:[%s0 + $0x18] sm:$0xff]
    %v36 = vld [vmem:[%s0 + $0x20] sm:$0xff]
    %v37 = vld [vmem:[%s0 + $0x28] sm:$0xff]
    %v38 = vld [vmem:[%s0 + $0x30] sm:$0xff]
    %v39 = vld [vmem:[%s0 + $0x38] sm:$0xff]
    %v40 = vld [vmem:[%s2] sm:$0xff]
    %v41 = vld [vmem:[%s2 + $0x8] sm:$0xff]
    %v42 = vld [vmem:[%s2 + $0x10] sm:$0xff]
    %v43 = vld [vmem:[%s2 + $0x18] sm:$0xff]
    %v44 = vld [vmem:[%s2 + $0x20] sm:$0xff]
    %v45 = vld [vmem:[%s2 + $0x28] sm:$0xff]
    %v46 = vld [vmem:[%s2 + $0x30] sm:$0xff]
    %v47 = vld [vmem:[%s2 + $0x38] sm:$0xff]
    %v48 = vld [vmem:[%s5] sm:$0x3]
    %v50 = vperm.slane %v48, 0
    %v51 = vperm.slane %v48, 1
    %vm54 = vcmask 261120
    %v56 = vsel %vm54, %v32, 0
    %v59 = vsel %vm54, %v33, 0
    %v62 = vsel %vm54, %v34, 0
    %v65 = vsel %vm54, %v35, 0
    %v68 = vsel %vm54, %v36, 0
    %v71 = vsel %vm54, %v37, 0
    %v74 = vsel %vm54, %v38, 0
    %v77 = vsel %vm54, %v39, 0
    %79 = vmatpush.msra.mxu0 0.0
    %80 = vmatpush.msra.mxu0 0.0
    %81 = vmatpush.msra.mxu0 0.0
    %82 = vmatpush.msra.mxu0 0.0
    %83 = vmatpush.msra.mxu0 0.0
    %84 = vmatpush.msra.mxu0 0.0
    %85 = vmatpush.msra.mxu0 0.0
    %86 = vmatpush.msra.mxu0 0.0
    %87 = vmatpush.msra.mxu0 0.0
    %88 = vmatpush.msra.mxu0 0.0
    %89 = vmatpush.msra.mxu0 0.0
    %90 = vmatpush.msra.mxu0 0.0
    %91 = vmatpush.msra.mxu0 %v46
    %92 = vmatpush.msra.mxu0 %v44
    %93 = vmatpush.msra.mxu0 %v42
    %94 = vmatpush.msra.mxu0 %v40
    %95 = vmatmul.f32.gmra.mxu0 %v56
    %v96 = vpop.f32.mrf.mxu0
    %v97 = vadd.f32 %v50, %v96
    %98 = vmatmul.f32.gmra.mxu0 %v59
    %v99 = vpop.f32.mrf.mxu0
    %v100 = vadd.f32 %v50, %v99
    %101 = vmatmul.f32.gmra.mxu0 %v62
    %v102 = vpop.f32.mrf.mxu0
    %v103 = vadd.f32 %v50, %v102
    %104 = vmatmul.f32.gmra.mxu0 %v65
    %v105 = vpop.f32.mrf.mxu0
    %v106 = vadd.f32 %v50, %v105
    %107 = vmatmul.f32.gmra.mxu0 %v68
    %v108 = vpop.f32.mrf.mxu0
    %v109 = vadd.f32 %v50, %v108
    %110 = vmatmul.f32.gmra.mxu0 %v71
    %v111 = vpop.f32.mrf.mxu0
    %v112 = vadd.f32 %v50, %v111
    %113 = vmatmul.f32.gmra.mxu0 %v74
    %v114 = vpop.f32.mrf.mxu0
    %v115 = vadd.f32 %v50, %v114
    %116 = vmatmul.f32.gmra.mxu0 %v77
    %v117 = vpop.f32.mrf.mxu0
    %v118 = vadd.f32 %v50, %v117
    %119 = vdwg.mxu0
    %120 = vmatpush.msra.mxu0 0.0
    %121 = vmatpush.msra.mxu0 0.0
    %122 = vmatpush.msra.mxu0 0.0
    %123 = vmatpush.msra.mxu0 0.0
    %124 = vmatpush.msra.mxu0 0.0
    %125 = vmatpush.msra.mxu0 0.0
    %126 = vmatpush.msra.mxu0 0.0
    %127 = vmatpush.msra.mxu0 0.0
    %128 = vmatpush.msra.mxu0 0.0
    %129 = vmatpush.msra.mxu0 0.0
    %130 = vmatpush.msra.mxu0 0.0
    %131 = vmatpush.msra.mxu0 0.0
    %132 = vmatpush.msra.mxu0 %v47
    %133 = vmatpush.msra.mxu0 %v45
    %134 = vmatpush.msra.mxu0 %v43
    %135 = vmatpush.msra.mxu0 %v41
    %136 = vmatmul.f32.gmra.mxu0 %v56
    %v137 = vpop.f32.mrf.mxu0
    %v138 = vadd.f32 %v51, %v137
    %139 = vmatmul.f32.gmra.mxu0 %v59
    %v140 = vpop.f32.mrf.mxu0
    %v141 = vadd.f32 %v51, %v140
    %142 = vmatmul.f32.gmra.mxu0 %v62
    %v143 = vpop.f32.mrf.mxu0
    %v144 = vadd.f32 %v51, %v143
    %145 = vmatmul.f32.gmra.mxu0 %v65
    %v146 = vpop.f32.mrf.mxu0
    %v147 = vadd.f32 %v51, %v146
    %148 = vmatmul.f32.gmra.mxu0 %v68
    %v149 = vpop.f32.mrf.mxu0
    %v150 = vadd.f32 %v51, %v149
    %151 = vmatmul.f32.gmra.mxu0 %v71
    %v152 = vpop.f32.mrf.mxu0
    %v153 = vadd.f32 %v51, %v152
    %154 = vmatmul.f32.gmra.mxu0 %v74
    %v155 = vpop.f32.mrf.mxu0
    %v156 = vadd.f32 %v51, %v155
    %157 = vmatmul.f32.gmra.mxu0 %v77
    %v158 = vpop.f32.mrf.mxu0
    %v159 = vadd.f32 %v51, %v158
    %160 = vdwg.mxu0
    %161 = vst [vmem:[#allocation2] sm:$0xff] %v97
    %vm162 = vcmask 523264
    %163 = vst.msk [vmem:[#allocation2 + $0x8] sm:$0xff] %vm162, %v138
    %164 = vst [vmem:[#allocation2 + $0x10] sm:$0xff] %v100
    %165 = vst.msk [vmem:[#allocation2 + $0x18] sm:$0xff] %vm162, %v141
    %166 = vst [vmem:[#allocation2 + $0x20] sm:$0xff] %v103
    %167 = vst.msk [vmem:[#allocation2 + $0x28] sm:$0xff] %vm162, %v144
    %168 = vst [vmem:[#allocation2 + $0x30] sm:$0xff] %v106
    %169 = vst.msk [vmem:[#allocation2 + $0x38] sm:$0xff] %vm162, %v147
    %170 = vst [vmem:[#allocation2 + $0x40] sm:$0xff] %v109
    %171 = vst.msk [vmem:[#allocation2 + $0x48] sm:$0xff] %vm162, %v150
    %172 = vst [vmem:[#allocation2 + $0x50] sm:$0xff] %v112
    %173 = vst.msk [vmem:[#allocation2 + $0x58] sm:$0xff] %vm162, %v153
    %174 = vst [vmem:[#allocation2 + $0x60] sm:$0xff] %v115
    %175 = vst.msk [vmem:[#allocation2 + $0x68] sm:$0xff] %vm162, %v156
    %176 = vst [vmem:[#allocation2 + $0x70] sm:$0xff] %v118
    %177 = vst.msk [vmem:[#allocation2 + $0x78] sm:$0xff] %vm162, %v159
    %v178 = vld [vmem:[%s1] sm:$0xff]
    %v179 = vld [vmem:[%s6] sm:$0x1]
    %v180 = vld [vmem:[%s7] sm:$0x1]
    %vm181 = vcmp.gt.s32.totalorder %v178, 0
    %vm182 = vcmp.gt.s32.totalorder %v178, 7
    %v183 = vld [vmem:[#allocation2] sm:$0xff]
    %v184 = vld [vmem:[%s3] sm:$0xff]
    %v185 = vld [vmem:[%s3 + $0x8] sm:$0xff]
    %v186 = vld [vmem:[%s3 + $0x10] sm:$0xff]
    %v187 = vld [vmem:[%s3 + $0x18] sm:$0xff]
    %v189 = vsel %vm54, 0.0, 0
    %191 = vmatpush.msra.mxu0 0.0
    %192 = vmatpush.msra.mxu0 0.0
    %193 = vmatpush.msra.mxu0 0.0
    %194 = vmatpush.msra.mxu0 0.0
    %195 = vmatpush.msra.mxu0 0.0
    %196 = vmatpush.msra.mxu0 0.0
    %197 = vmatpush.msra.mxu0 0.0
    %198 = vmatpush.msra.mxu0 0.0
    %199 = vmatpush.msra.mxu0 0.0
    %200 = vmatpush.msra.mxu0 0.0
    %201 = vmatpush.msra.mxu0 0.0
    %202 = vmatpush.msra.mxu0 0.0
    %203 = vmatpush.msra.mxu0 %v187
    %204 = vmatpush.msra.mxu0 %v186
    %205 = vmatpush.msra.mxu0 %v185
    %206 = vmatpush.msra.mxu0 %v184
    %207 = vmatmul.f32.gmra.mxu0 %v189
    %v208 = vpop.f32.mrf.mxu0
    %v209 = vadd.f32 0.0, %v208
    %210 = vdwg.mxu0
    %v211 = vadd.f32 %v183, %v209
    %v212 = vxor.u32 %v211, 2147483648
    %v213 = vmul.f32 %v212, 1.442695
    %v214 = vpow.pop %v213
    %v215 = vadd.f32 %v214, 1.0
    %v216 = vrcp.pop %v215
    %v217 = vmul.f32 %v215, %v216
    %v218 = vsub.f32 1.0, %v217
    %v219 = vmul.f32 %v216, %v218
    %v220 = vadd.f32 %v216, %v219
    %vm221 = vweird.f32 %v215
    %vm222 = vweird.f32 %v216
    %vm223 = vmor %vm221, %vm222
    %v224 = vsel %vm223, %v216, %v220
    %v225 = vand.u32 2147483647, %v215
    %vm226 = vcmp.eq.f32.partialorder %v225, 8.507059e+37
    %v227 = vand.u32 %v215, 2147483648
    %v228 = vor.u32 1.1754944e-38, %v227
    %v229 = vsel %vm226, %v228, %v224
    %v230 = vmul.f32 1.0, %v229
    %v232 = vperm.slane %v179, 0
    %233 = vrot.lane.b32.xlu0 %v232, 64
    %v234 = vpop.permute.xlu0 %233
    %v236 = vadd.f32 %v209, %v234
    %238 = vrot.lane.b32.xlu0 %v236, 64
    %v239 = vpop.permute.xlu0 %238
    %v241 = vmul.f32 %v230, %v239
    %243 = vrot.lane.b32.xlu0 %v241, 64
    %v244 = vpop.permute.xlu0 %243
    %v246 = vadd.f32 %v183, %v244
    %v247 = vtanh.pop %v246
    %v248 = vsub.f32 1.0, %v230
    %250 = vrot.lane.b32.xlu0 %v247, 96
    %v251 = vpop.permute.xlu0 %250
    %v253 = vmul.f32 %v248, %v251
    %v254 = vmul.f32 %v230, 0.0
    %v255 = vadd.f32 %v253, %v254
    %s256 = scalar_lea.vmem [#allocation2], 112
    %v257 = vld [vmem:[%s256] sm:$0xff]
    %v258 = vld [vmem:[%s256 + $0x8] sm:$0xff]
    %v259 = vld [vmem:[%s4] sm:$0xff]
    %v260 = vld [vmem:[%s4 + $0x8] sm:$0xff]
    %v261 = vld [vmem:[%s4 + $0x10] sm:$0xff]
    %v262 = vld [vmem:[%s4 + $0x18] sm:$0xff]
    %263 = vmatpush.msra.mxu0 0.0
    %264 = vmatpush.msra.mxu0 0.0
    %265 = vmatpush.msra.mxu0 0.0
    %266 = vmatpush.msra.mxu0 0.0
    %267 = vmatpush.msra.mxu0 0.0
    %268 = vmatpush.msra.mxu0 0.0
    %269 = vmatpush.msra.mxu0 0.0
    %270 = vmatpush.msra.mxu0 0.0
    %271 = vmatpush.msra.mxu0 0.0
    %272 = vmatpush.msra.mxu0 0.0
    %273 = vmatpush.msra.mxu0 0.0
    %274 = vmatpush.msra.mxu0 0.0
    %275 = vmatpush.msra.mxu0 %v262
    %276 = vmatpush.msra.mxu0 %v261
    %277 = vmatpush.msra.mxu0 %v260
    %278 = vmatpush.msra.mxu0 %v259
    %279 = vmatmul.f32.gmra.mxu0 %v189
    %v280 = vpop.f32.mrf.mxu0
    %v281 = vadd.f32 0.0, %v280
    %282 = vdwg.mxu0
    %284 = vrot.lane.b32.xlu0 %v281, 96
    %v285 = vpop.permute.xlu0 %284
    %v287 = vadd.f32 %v257, %v285
    %v288 = vxor.u32 %v287, 2147483648
    %v289 = vmul.f32 %v288, 1.442695
    %v290 = vpow.pop %v289
    %v291 = vadd.f32 %v290, 1.0
    %v292 = vrcp.pop %v291
    %v293 = vmul.f32 %v291, %v292
    %v294 = vsub.f32 1.0, %v293
    %v295 = vmul.f32 %v292, %v294
    %v296 = vadd.f32 %v292, %v295
    %vm297 = vweird.f32 %v291
    %vm298 = vweird.f32 %v292
    %vm299 = vmor %vm297, %vm298
    %v300 = vsel %vm299, %v292, %v296
    %v301 = vand.u32 2147483647, %v291
    %vm302 = vcmp.eq.f32.partialorder %v301, 8.507059e+37
    %v303 = vand.u32 %v291, 2147483648
    %v304 = vor.u32 1.1754944e-38, %v303
    %v305 = vsel %vm302, %v304, %v300
    %v306 = vmul.f32 1.0, %v305
    %v307 = vadd.f32 %v258, %v285
    %v308 = vxor.u32 %v307, 2147483648
    %v309 = vmul.f32 %v308, 1.442695
    %v310 = vpow.pop %v309
    %v311 = vadd.f32 %v310, 1.0
    %v312 = vrcp.pop %v311
    %v313 = vmul.f32 %v311, %v312
    %v314 = vsub.f32 1.0, %v313
    %v315 = vmul.f32 %v312, %v314
    %v316 = vadd.f32 %v312, %v315
    %vm317 = vweird.f32 %v311
    %vm318 = vweird.f32 %v312
    %vm319 = vmor %vm317, %vm318
    %v320 = vsel %vm319, %v312, %v316
    %v321 = vand.u32 2147483647, %v311
    %vm322 = vcmp.eq.f32.partialorder %v321, 8.507059e+37
    %v323 = vand.u32 %v311, 2147483648
    %v324 = vor.u32 1.1754944e-38, %v323
    %v325 = vsel %vm322, %v324, %v320
    %v326 = vmul.f32 1.0, %v325
    %v328 = vperm.slane %v180, 0
    %329 = vrot.lane.b32.xlu0 %v328, 64
    %v330 = vpop.permute.xlu0 %329
    %v332 = vadd.f32 %v281, %v330
    %334 = vrot.lane.b32.xlu0 %v332, 32
    %v335 = vpop.permute.xlu0 %334
    %v337 = vmul.f32 %v306, %v335
    %339 = vrot.lane.b32.xlu0 %v337, 64
    %v340 = vpop.permute.xlu0 %339
    %v342 = vadd.f32 %v258, %v340
    %v343 = vtanh.pop %v342
    %v344 = vsub.f32 1.0, %v326
    %346 = vrot.lane.b32.xlu0 %v343, 96
    %v347 = vpop.permute.xlu0 %346
    %v349 = vmul.f32 %v344, %v347
    %v350 = vmul.f32 %v326, 0.0
    %v351 = vadd.f32 %v349, %v350
    %v352 = vsel %vm181, 1, 0
    %353 = vset.pattern.permute.xlu0 0
    %354 = vperm.xlu0 %353, %v352
    %v355 = vpop.permute.xlu0 %354
    %vm356 = vcmp.eq.s32.totalorder %v355, 1
    %v357 = vsel %vm356, %v255, 0.0
    %v358 = vsel %vm182, 1, 0
    %359 = vset.pattern.permute.xlu0 0
    %360 = vperm.xlu0 %359, %v358
    %v361 = vpop.permute.xlu0 %360
    %vm362 = vcmp.eq.s32.totalorder %v361, 1
    %v363 = vsel %vm362, %v351, 0.0
    %365 = vrot.lane.b32.xlu0 %v357, 96
    %v366 = vpop.permute.xlu0 %365
    %368 = vst.msk [vmem:[%s8] sm:$0xff] %vm54, %v366
    %370 = vrot.lane.b32.xlu0 %v363, 32
    %v371 = vpop.permute.xlu0 %370
    %s373 = scalar_lea.vmem %s8, 56
    %vm374 = vcmask 523520
    %375 = vst.msk [vmem:[%s373] sm:$0xff] %vm374, %v371
    %vm376 = vcmp.gt.s32.totalorder %v178, 1
    %vm377 = vcmp.gt.s32.totalorder %v178, 6
    %s378 = scalar_lea.vmem [#allocation2], 16
    %v379 = vld [vmem:[%s378] sm:$0xff]
    %v380 = vld [vmem:[%s3] sm:$0xff]
    %v381 = vld [vmem:[%s3 + $0x8] sm:$0xff]
    %v382 = vld [vmem:[%s3 + $0x10] sm:$0xff]
    %v383 = vld [vmem:[%s3 + $0x18] sm:$0xff]
    %v384 = vsel %vm54, %v366, 0
    %386 = vmatpush.msra.mxu0 0.0
    %387 = vmatpush.msra.mxu0 0.0
    %388 = vmatpush.msra.mxu0 0.0
    %389 = vmatpush.msra.mxu0 0.0
    %390 = vmatpush.msra.mxu0 0.0
    %391 = vmatpush.msra.mxu0 0.0
    %392 = vmatpush.msra.mxu0 0.0
    %393 = vmatpush.msra.mxu0 0.0
    %394 = vmatpush.msra.mxu0 0.0
    %395 = vmatpush.msra.mxu0 0.0
    %396 = vmatpush.msra.mxu0 0.0
    %397 = vmatpush.msra.mxu0 0.0
    %398 = vmatpush.msra.mxu0 %v383
    %399 = vmatpush.msra.mxu0 %v382
    %400 = vmatpush.msra.mxu0 %v381
    %401 = vmatpush.msra.mxu0 %v380
    %402 = vmatmul.f32.gmra.mxu0 %v384
    %v403 = vpop.f32.mrf.mxu0
    %v404 = vadd.f32 0.0, %v403
    %405 = vdwg.mxu0
    %v406 = vadd.f32 %v379, %v404
    %v407 = vxor.u32 %v406, 2147483648
    %v408 = vmul.f32 %v407, 1.442695
    %v409 = vpow.pop %v408
    %v410 = vadd.f32 %v409, 1.0
    %v411 = vrcp.pop %v410
    %v412 = vmul.f32 %v410, %v411
    %v413 = vsub.f32 1.0, %v412
    %v414 = vmul.f32 %v411, %v413
    %v415 = vadd.f32 %v411, %v414
    %vm416 = vweird.f32 %v410
    %vm417 = vweird.f32 %v411
    %vm418 = vmor %vm416, %vm417
    %v419 = vsel %vm418, %v411, %v415
    %v420 = vand.u32 2147483647, %v410
    %vm421 = vcmp.eq.f32.partialorder %v420, 8.507059e+37
    %v422 = vand.u32 %v410, 2147483648
    %v423 = vor.u32 1.1754944e-38, %v422
    %v424 = vsel %vm421, %v423, %v419
    %v425 = vmul.f32 1.0, %v424
    %v426 = vadd.f32 %v404, %v234
    %428 = vrot.lane.b32.xlu0 %v426, 64
    %v429 = vpop.permute.xlu0 %428
    %v431 = vmul.f32 %v425, %v429
    %433 = vrot.lane.b32.xlu0 %v431, 64
    %v434 = vpop.permute.xlu0 %433
    %v436 = vadd.f32 %v379, %v434
    %v437 = vtanh.pop %v436
    %v438 = vsub.f32 1.0, %v425
    %440 = vrot.lane.b32.xlu0 %v437, 96
    %v441 = vpop.permute.xlu0 %440
    %v443 = vmul.f32 %v438, %v441
    %v444 = vmul.f32 %v425, %v357
    %v445 = vadd.f32 %v443, %v444
    %s446 = scalar_lea.vmem [#allocation2], 96
    %v447 = vld [vmem:[%s446] sm:$0xff]
    %v448 = vld [vmem:[%s446 + $0x8] sm:$0xff]
    %v449 = vld [vmem:[%s4] sm:$0xff]
    %v450 = vld [vmem:[%s4 + $0x8] sm:$0xff]
    %v451 = vld [vmem:[%s4 + $0x10] sm:$0xff]
    %v452 = vld [vmem:[%s4 + $0x18] sm:$0xff]
    %v453 = vsel %vm54, %v363, 0
    %455 = vmatpush.msra.mxu0 0.0
    %456 = vmatpush.msra.mxu0 0.0
    %457 = vmatpush.msra.mxu0 0.0
    %458 = vmatpush.msra.mxu0 0.0
    %459 = vmatpush.msra.mxu0 0.0
    %460 = vmatpush.msra.mxu0 0.0
    %461 = vmatpush.msra.mxu0 0.0
    %462 = vmatpush.msra.mxu0 0.0
    %463 = vmatpush.msra.mxu0 0.0
    %464 = vmatpush.msra.mxu0 0.0
    %465 = vmatpush.msra.mxu0 0.0
    %466 = vmatpush.msra.mxu0 0.0
    %467 = vmatpush.msra.mxu0 %v452
    %468 = vmatpush.msra.mxu0 %v451
    %469 = vmatpush.msra.mxu0 %v450
    %470 = vmatpush.msra.mxu0 %v449
    %471 = vmatmul.f32.gmra.mxu0 %v453
    %v472 = vpop.f32.mrf.mxu0
    %v473 = vadd.f32 0.0, %v472
    %474 = vdwg.mxu0
    %476 = vrot.lane.b32.xlu0 %v473, 96
    %v477 = vpop.permute.xlu0 %476
    %v479 = vadd.f32 %v447, %v477
    %v480 = vxor.u32 %v479, 2147483648
    %v481 = vmul.f32 %v480, 1.442695
    %v482 = vpow.pop %v481
    %v483 = vadd.f32 %v482, 1.0
    %v484 = vrcp.pop %v483
    %v485 = vmul.f32 %v483, %v484
    %v486 = vsub.f32 1.0, %v485
    %v487 = vmul.f32 %v484, %v486
    %v488 = vadd.f32 %v484, %v487
    %vm489 = vweird.f32 %v483
    %vm490 = vweird.f32 %v484
    %vm491 = vmor %vm489, %vm490
    %v492 = vsel %vm491, %v484, %v488
    %v493 = vand.u32 2147483647, %v483
    %vm494 = vcmp.eq.f32.partialorder %v493, 8.507059e+37
    %v495 = vand.u32 %v483, 2147483648
    %v496 = vor.u32 1.1754944e-38, %v495
    %v497 = vsel %vm494, %v496, %v492
    %v498 = vmul.f32 1.0, %v497
    %v499 = vadd.f32 %v448, %v477
    %v500 = vxor.u32 %v499, 2147483648
    %v501 = vmul.f32 %v500, 1.442695
    %v502 = vpow.pop %v501
    %v503 = vadd.f32 %v502, 1.0
    %v504 = vrcp.pop %v503
    %v505 = vmul.f32 %v503, %v504
    %v506 = vsub.f32 1.0, %v505
    %v507 = vmul.f32 %v504, %v506
    %v508 = vadd.f32 %v504, %v507
    %vm509 = vweird.f32 %v503
    %vm510 = vweird.f32 %v504
    %vm511 = vmor %vm509, %vm510
    %v512 = vsel %vm511, %v504, %v508
    %v513 = vand.u32 2147483647, %v503
    %vm514 = vcmp.eq.f32.partialorder %v513, 8.507059e+37
    %v515 = vand.u32 %v503, 2147483648
    %v516 = vor.u32 1.1754944e-38, %v515
    %v517 = vsel %vm514, %v516, %v512
    %v518 = vmul.f32 1.0, %v517
    %v519 = vadd.f32 %v473, %v330
    %521 = vrot.lane.b32.xlu0 %v519, 32
    %v522 = vpop.permute.xlu0 %521
    %v524 = vmul.f32 %v498, %v522
    %526 = vrot.lane.b32.xlu0 %v524, 64
    %v527 = vpop.permute.xlu0 %526
    %v529 = vadd.f32 %v448, %v527
    %v530 = vtanh.pop %v529
    %v531 = vsub.f32 1.0, %v518
    %533 = vrot.lane.b32.xlu0 %v530, 96
    %v534 = vpop.permute.xlu0 %533
    %v536 = vmul.f32 %v531, %v534
    %v537 = vmul.f32 %v518, %v363
    %v538 = vadd.f32 %v536, %v537
    %v539 = vsel %vm376, 1, 0
    %540 = vset.pattern.permute.xlu0 0
    %541 = vperm.xlu0 %540, %v539
    %v542 = vpop.permute.xlu0 %541
    %vm543 = vcmp.eq.s32.totalorder %v542, 1
    %v544 = vsel %vm543, %v445, %v357
    %v545 = vsel %vm377, 1, 0
    %546 = vset.pattern.permute.xlu0 0
    %547 = vperm.xlu0 %546, %v545
    %v548 = vpop.permute.xlu0 %547
    %vm549 = vcmp.eq.s32.totalorder %v548, 1
    %v550 = vsel %vm549, %v538, %v363
    %v551 = vsel %vm543, %v445, 0.0
    %553 = vrot.lane.b32.xlu0 %v551, 96
    %v554 = vpop.permute.xlu0 %553
    %s556 = scalar_lea.vmem %s8, 8
    %557 = vst.msk [vmem:[%s556] sm:$0xff] %vm54, %v554
    %v558 = vsel %vm549, %v538, 0.0
    %560 = vrot.lane.b32.xlu0 %v558, 32
    %v561 = vpop.permute.xlu0 %560
    %s563 = scalar_lea.vmem %s8, 48
    %564 = vst.msk [vmem:[%s563] sm:$0xff] %vm374, %v561
    %vm565 = vcmp.gt.s32.totalorder %v178, 2
    %vm566 = vcmp.gt.s32.totalorder %v178, 5
    %s567 = scalar_lea.vmem [#allocation2], 32
    %v568 = vld [vmem:[%s567] sm:$0xff]
    %v569 = vld [vmem:[%s3] sm:$0xff]
    %v570 = vld [vmem:[%s3 + $0x8] sm:$0xff]
    %v571 = vld [vmem:[%s3 + $0x10] sm:$0xff]
    %v572 = vld [vmem:[%s3 + $0x18] sm:$0xff]
    %574 = vrot.lane.b32.xlu0 %v544, 96
    %v575 = vpop.permute.xlu0 %574
    %v576 = vsel %vm54, %v575, 0
    %578 = vmatpush.msra.mxu0 0.0
    %579 = vmatpush.msra.mxu0 0.0
    %580 = vmatpush.msra.mxu0 0.0
    %581 = vmatpush.msra.mxu0 0.0
    %582 = vmatpush.msra.mxu0 0.0
    %583 = vmatpush.msra.mxu0 0.0
    %584 = vmatpush.msra.mxu0 0.0
    %585 = vmatpush.msra.mxu0 0.0
    %586 = vmatpush.msra.mxu0 0.0
    %587 = vmatpush.msra.mxu0 0.0
    %588 = vmatpush.msra.mxu0 0.0
    %589 = vmatpush.msra.mxu0 0.0
    %590 = vmatpush.msra.mxu0 %v572
    %591 = vmatpush.msra.mxu0 %v571
    %592 = vmatpush.msra.mxu0 %v570
    %593 = vmatpush.msra.mxu0 %v569
    %594 = vmatmul.f32.gmra.mxu0 %v576
    %v595 = vpop.f32.mrf.mxu0
    %v596 = vadd.f32 0.0, %v595
    %597 = vdwg.mxu0
    %v598 = vadd.f32 %v568, %v596
    %v599 = vxor.u32 %v598, 2147483648
    %v600 = vmul.f32 %v599, 1.442695
    %v601 = vpow.pop %v600
    %v602 = vadd.f32 %v601, 1.0
    %v603 = vrcp.pop %v602
    %v604 = vmul.f32 %v602, %v603
    %v605 = vsub.f32 1.0, %v604
    %v606 = vmul.f32 %v603, %v605
    %v607 = vadd.f32 %v603, %v606
    %vm608 = vweird.f32 %v602
    %vm609 = vweird.f32 %v603
    %vm610 = vmor %vm608, %vm609
    %v611 = vsel %vm610, %v603, %v607
    %v612 = vand.u32 2147483647, %v602
    %vm613 = vcmp.eq.f32.partialorder %v612, 8.507059e+37
    %v614 = vand.u32 %v602, 2147483648
    %v615 = vor.u32 1.1754944e-38, %v614
    %v616 = vsel %vm613, %v615, %v611
    %v617 = vmul.f32 1.0, %v616
    %v618 = vadd.f32 %v596, %v234
    %620 = vrot.lane.b32.xlu0 %v618, 64
    %v621 = vpop.permute.xlu0 %620
    %v623 = vmul.f32 %v617, %v621
    %625 = vrot.lane.b32.xlu0 %v623, 64
    %v626 = vpop.permute.xlu0 %625
    %v628 = vadd.f32 %v568, %v626
    %v629 = vtanh.pop %v628
    %v630 = vsub.f32 1.0, %v617
    %632 = vrot.lane.b32.xlu0 %v629, 96
    %v633 = vpop.permute.xlu0 %632
    %v635 = vmul.f32 %v630, %v633
    %v636 = vmul.f32 %v617, %v544
    %v637 = vadd.f32 %v635, %v636
    %s638 = scalar_lea.vmem [#allocation2], 80
    %v639 = vld [vmem:[%s638] sm:$0xff]
    %v640 = vld [vmem:[%s638 + $0x8] sm:$0xff]
    %v641 = vld [vmem:[%s4] sm:$0xff]
    %v642 = vld [vmem:[%s4 + $0x8] sm:$0xff]
    %v643 = vld [vmem:[%s4 + $0x10] sm:$0xff]
    %v644 = vld [vmem:[%s4 + $0x18] sm:$0xff]
    %v646 = vsel %vm54, %v550, 0
    %648 = vmatpush.msra.mxu0 0.0
    %649 = vmatpush.msra.mxu0 0.0
    %650 = vmatpush.msra.mxu0 0.0
    %651 = vmatpush.msra.mxu0 0.0
    %652 = vmatpush.msra.mxu0 0.0
    %653 = vmatpush.msra.mxu0 0.0
    %654 = vmatpush.msra.mxu0 0.0
    %655 = vmatpush.msra.mxu0 0.0
    %656 = vmatpush.msra.mxu0 0.0
    %657 = vmatpush.msra.mxu0 0.0
    %658 = vmatpush.msra.mxu0 0.0
    %659 = vmatpush.msra.mxu0 0.0
    %660 = vmatpush.msra.mxu0 %v644
    %661 = vmatpush.msra.mxu0 %v643
    %662 = vmatpush.msra.mxu0 %v642
    %663 = vmatpush.msra.mxu0 %v641
    %664 = vmatmul.f32.gmra.mxu0 %v646
    %v665 = vpop.f32.mrf.mxu0
    %v666 = vadd.f32 0.0, %v665
    %667 = vdwg.mxu0
    %669 = vrot.lane.b32.xlu0 %v666, 96
    %v670 = vpop.permute.xlu0 %669
    %v672 = vadd.f32 %v639, %v670
    %v673 = vxor.u32 %v672, 2147483648
    %v674 = vmul.f32 %v673, 1.442695
    %v675 = vpow.pop %v674
    %v676 = vadd.f32 %v675, 1.0
    %v677 = vrcp.pop %v676
    %v678 = vmul.f32 %v676, %v677
    %v679 = vsub.f32 1.0, %v678
    %v680 = vmul.f32 %v677, %v679
    %v681 = vadd.f32 %v677, %v680
    %vm682 = vweird.f32 %v676
    %vm683 = vweird.f32 %v677
    %vm684 = vmor %vm682, %vm683
    %v685 = vsel %vm684, %v677, %v681
    %v686 = vand.u32 2147483647, %v676
    %vm687 = vcmp.eq.f32.partialorder %v686, 8.507059e+37
    %v688 = vand.u32 %v676, 2147483648
    %v689 = vor.u32 1.1754944e-38, %v688
    %v690 = vsel %vm687, %v689, %v685
    %v691 = vmul.f32 1.0, %v690
    %v692 = vadd.f32 %v640, %v670
    %v693 = vxor.u32 %v692, 2147483648
    %v694 = vmul.f32 %v693, 1.442695
    %v695 = vpow.pop %v694
    %v696 = vadd.f32 %v695, 1.0
    %v697 = vrcp.pop %v696
    %v698 = vmul.f32 %v696, %v697
    %v699 = vsub.f32 1.0, %v698
    %v700 = vmul.f32 %v697, %v699
    %v701 = vadd.f32 %v697, %v700
    %vm702 = vweird.f32 %v696
    %vm703 = vweird.f32 %v697
    %vm704 = vmor %vm702, %vm703
    %v705 = vsel %vm704, %v697, %v701
    %v706 = vand.u32 2147483647, %v696
    %vm707 = vcmp.eq.f32.partialorder %v706, 8.507059e+37
    %v708 = vand.u32 %v696, 2147483648
    %v709 = vor.u32 1.1754944e-38, %v708
    %v710 = vsel %vm707, %v709, %v705
    %v711 = vmul.f32 1.0, %v710
    %v712 = vadd.f32 %v666, %v330
    %714 = vrot.lane.b32.xlu0 %v712, 32
    %v715 = vpop.permute.xlu0 %714
    %v717 = vmul.f32 %v691, %v715
    %719 = vrot.lane.b32.xlu0 %v717, 64
    %v720 = vpop.permute.xlu0 %719
    %v722 = vadd.f32 %v640, %v720
    %v723 = vtanh.pop %v722
    %v724 = vsub.f32 1.0, %v711
    %726 = vrot.lane.b32.xlu0 %v723, 96
    %v727 = vpop.permute.xlu0 %726
    %v729 = vmul.f32 %v724, %v727
    %v730 = vmul.f32 %v711, %v550
    %v731 = vadd.f32 %v729, %v730
    %v732 = vsel %vm565, 1, 0
    %733 = vset.pattern.permute.xlu0 0
    %734 = vperm.xlu0 %733, %v732
    %v735 = vpop.permute.xlu0 %734
    %vm736 = vcmp.eq.s32.totalorder %v735, 1
    %v737 = vsel %vm736, %v637, %v544
    %v738 = vsel %vm566, 1, 0
    %739 = vset.pattern.permute.xlu0 0
    %740 = vperm.xlu0 %739, %v738
    %v741 = vpop.permute.xlu0 %740
    %vm742 = vcmp.eq.s32.totalorder %v741, 1
    %v743 = vsel %vm742, %v731, %v550
    %v744 = vsel %vm736, %v637, 0.0
    %746 = vrot.lane.b32.xlu0 %v744, 96
    %v747 = vpop.permute.xlu0 %746
    %s749 = scalar_lea.vmem %s8, 16
    %750 = vst.msk [vmem:[%s749] sm:$0xff] %vm54, %v747
    %v751 = vsel %vm742, %v731, 0.0
    %753 = vrot.lane.b32.xlu0 %v751, 32
    %v754 = vpop.permute.xlu0 %753
    %s756 = scalar_lea.vmem %s8, 40
    %757 = vst.msk [vmem:[%s756] sm:$0xff] %vm374, %v754
    %vm758 = vcmp.gt.s32.totalorder %v178, 3
    %vm759 = vcmp.gt.s32.totalorder %v178, 4
    %s760 = scalar_lea.vmem [#allocation2], 48
    %v761 = vld [vmem:[%s760] sm:$0xff]
    %v762 = vld [vmem:[%s3] sm:$0xff]
    %v763 = vld [vmem:[%s3 + $0x8] sm:$0xff]
    %v764 = vld [vmem:[%s3 + $0x10] sm:$0xff]
    %v765 = vld [vmem:[%s3 + $0x18] sm:$0xff]
    %767 = vrot.lane.b32.xlu0 %v737, 96
    %v768 = vpop.permute.xlu0 %767
    %v769 = vsel %vm54, %v768, 0
    %771 = vmatpush.msra.mxu0 0.0
    %772 = vmatpush.msra.mxu0 0.0
    %773 = vmatpush.msra.mxu0 0.0
    %774 = vmatpush.msra.mxu0 0.0
    %775 = vmatpush.msra.mxu0 0.0
    %776 = vmatpush.msra.mxu0 0.0
    %777 = vmatpush.msra.mxu0 0.0
    %778 = vmatpush.msra.mxu0 0.0
    %779 = vmatpush.msra.mxu0 0.0
    %780 = vmatpush.msra.mxu0 0.0
    %781 = vmatpush.msra.mxu0 0.0
    %782 = vmatpush.msra.mxu0 0.0
    %783 = vmatpush.msra.mxu0 %v765
    %784 = vmatpush.msra.mxu0 %v764
    %785 = vmatpush.msra.mxu0 %v763
    %786 = vmatpush.msra.mxu0 %v762
    %787 = vmatmul.f32.gmra.mxu0 %v769
    %v788 = vpop.f32.mrf.mxu0
    %v789 = vadd.f32 0.0, %v788
    %790 = vdwg.mxu0
    %v791 = vadd.f32 %v761, %v789
    %v792 = vxor.u32 %v791, 2147483648
    %v793 = vmul.f32 %v792, 1.442695
    %v794 = vpow.pop %v793
    %v795 = vadd.f32 %v794, 1.0
    %v796 = vrcp.pop %v795
    %v797 = vmul.f32 %v795, %v796
    %v798 = vsub.f32 1.0, %v797
    %v799 = vmul.f32 %v796, %v798
    %v800 = vadd.f32 %v796, %v799
    %vm801 = vweird.f32 %v795
    %vm802 = vweird.f32 %v796
    %vm803 = vmor %vm801, %vm802
    %v804 = vsel %vm803, %v796, %v800
    %v805 = vand.u32 2147483647, %v795
    %vm806 = vcmp.eq.f32.partialorder %v805, 8.507059e+37
    %v807 = vand.u32 %v795, 2147483648
    %v808 = vor.u32 1.1754944e-38, %v807
    %v809 = vsel %vm806, %v808, %v804
    %v810 = vmul.f32 1.0, %v809
    %v811 = vadd.f32 %v789, %v234
    %813 = vrot.lane.b32.xlu0 %v811, 64
    %v814 = vpop.permute.xlu0 %813
    %v816 = vmul.f32 %v810, %v814
    %818 = vrot.lane.b32.xlu0 %v816, 64
    %v819 = vpop.permute.xlu0 %818
    %v821 = vadd.f32 %v761, %v819
    %v822 = vtanh.pop %v821
    %v823 = vsub.f32 1.0, %v810
    %825 = vrot.lane.b32.xlu0 %v822, 96
    %v826 = vpop.permute.xlu0 %825
    %v828 = vmul.f32 %v823, %v826
    %v829 = vmul.f32 %v810, %v737
    %v830 = vadd.f32 %v828, %v829
    %s831 = scalar_lea.vmem [#allocation2], 64
    %v832 = vld [vmem:[%s831] sm:$0xff]
    %v833 = vld [vmem:[%s831 + $0x8] sm:$0xff]
    %v834 = vld [vmem:[%s4] sm:$0xff]
    %v835 = vld [vmem:[%s4 + $0x8] sm:$0xff]
    %v836 = vld [vmem:[%s4 + $0x10] sm:$0xff]
    %v837 = vld [vmem:[%s4 + $0x18] sm:$0xff]
    %v839 = vsel %vm54, %v743, 0
    %841 = vmatpush.msra.mxu0 0.0
    %842 = vmatpush.msra.mxu0 0.0
    %843 = vmatpush.msra.mxu0 0.0
    %844 = vmatpush.msra.mxu0 0.0
    %845 = vmatpush.msra.mxu0 0.0
    %846 = vmatpush.msra.mxu0 0.0
    %847 = vmatpush.msra.mxu0 0.0
    %848 = vmatpush.msra.mxu0 0.0
    %849 = vmatpush.msra.mxu0 0.0
    %850 = vmatpush.msra.mxu0 0.0
    %851 = vmatpush.msra.mxu0 0.0
    %852 = vmatpush.msra.mxu0 0.0
    %853 = vmatpush.msra.mxu0 %v837
    %854 = vmatpush.msra.mxu0 %v836
    %855 = vmatpush.msra.mxu0 %v835
    %856 = vmatpush.msra.mxu0 %v834
    %857 = vmatmul.f32.gmra.mxu0 %v839
    %v858 = vpop.f32.mrf.mxu0
    %v859 = vadd.f32 0.0, %v858
    %860 = vdwg.mxu0
    %862 = vrot.lane.b32.xlu0 %v859, 96
    %v863 = vpop.permute.xlu0 %862
    %v865 = vadd.f32 %v832, %v863
    %v866 = vxor.u32 %v865, 2147483648
    %v867 = vmul.f32 %v866, 1.442695
    %v868 = vpow.pop %v867
    %v869 = vadd.f32 %v868, 1.0
    %v870 = vrcp.pop %v869
    %v871 = vmul.f32 %v869, %v870
    %v872 = vsub.f32 1.0, %v871
    %v873 = vmul.f32 %v870, %v872
    %v874 = vadd.f32 %v870, %v873
    %vm875 = vweird.f32 %v869
    %vm876 = vweird.f32 %v870
    %vm877 = vmor %vm875, %vm876
    %v878 = vsel %vm877, %v870, %v874
    %v879 = vand.u32 2147483647, %v869
    %vm880 = vcmp.eq.f32.partialorder %v879, 8.507059e+37
    %v881 = vand.u32 %v869, 2147483648
    %v882 = vor.u32 1.1754944e-38, %v881
    %v883 = vsel %vm880, %v882, %v878
    %v884 = vmul.f32 1.0, %v883
    %v885 = vadd.f32 %v833, %v863
    %v886 = vxor.u32 %v885, 2147483648
    %v887 = vmul.f32 %v886, 1.442695
    %v888 = vpow.pop %v887
    %v889 = vadd.f32 %v888, 1.0
    %v890 = vrcp.pop %v889
    %v891 = vmul.f32 %v889, %v890
    %v892 = vsub.f32 1.0, %v891
    %v893 = vmul.f32 %v890, %v892
    %v894 = vadd.f32 %v890, %v893
    %vm895 = vweird.f32 %v889
    %vm896 = vweird.f32 %v890
    %vm897 = vmor %vm895, %vm896
    %v898 = vsel %vm897, %v890, %v894
    %v899 = vand.u32 2147483647, %v889
    %vm900 = vcmp.eq.f32.partialorder %v899, 8.507059e+37
    %v901 = vand.u32 %v889, 2147483648
    %v902 = vor.u32 1.1754944e-38, %v901
    %v903 = vsel %vm900, %v902, %v898
    %v904 = vmul.f32 1.0, %v903
    %v905 = vadd.f32 %v859, %v330
    %907 = vrot.lane.b32.xlu0 %v905, 32
    %v908 = vpop.permute.xlu0 %907
    %v910 = vmul.f32 %v884, %v908
    %912 = vrot.lane.b32.xlu0 %v910, 64
    %v913 = vpop.permute.xlu0 %912
    %v915 = vadd.f32 %v833, %v913
    %v916 = vtanh.pop %v915
    %v917 = vsub.f32 1.0, %v904
    %919 = vrot.lane.b32.xlu0 %v916, 96
    %v920 = vpop.permute.xlu0 %919
    %v922 = vmul.f32 %v917, %v920
    %v923 = vmul.f32 %v904, %v743
    %v924 = vadd.f32 %v922, %v923
    %v925 = vsel %vm758, 1, 0
    %926 = vset.pattern.permute.xlu0 0
    %927 = vperm.xlu0 %926, %v925
    %v928 = vpop.permute.xlu0 %927
    %vm929 = vcmp.eq.s32.totalorder %v928, 1
    %v930 = vsel %vm929, %v830, %v737
    %v931 = vsel %vm759, 1, 0
    %932 = vset.pattern.permute.xlu0 0
    %933 = vperm.xlu0 %932, %v931
    %v934 = vpop.permute.xlu0 %933
    %vm935 = vcmp.eq.s32.totalorder %v934, 1
    %v936 = vsel %vm935, %v924, %v743
    %v937 = vsel %vm929, %v830, 0.0
    %939 = vrot.lane.b32.xlu0 %v937, 96
    %v940 = vpop.permute.xlu0 %939
    %s942 = scalar_lea.vmem %s8, 24
    %943 = vst.msk [vmem:[%s942] sm:$0xff] %vm54, %v940
    %v944 = vsel %vm935, %v924, 0.0
    %946 = vrot.lane.b32.xlu0 %v944, 32
    %v947 = vpop.permute.xlu0 %946
    %s949 = scalar_lea.vmem %s8, 32
    %950 = vst.msk [vmem:[%s949] sm:$0xff] %vm374, %v947
    %v951 = vld [vmem:[%s831] sm:$0xff]
    %v952 = vld [vmem:[%s3] sm:$0xff]
    %v953 = vld [vmem:[%s3 + $0x8] sm:$0xff]
    %v954 = vld [vmem:[%s3 + $0x10] sm:$0xff]
    %v955 = vld [vmem:[%s3 + $0x18] sm:$0xff]
    %957 = vrot.lane.b32.xlu0 %v930, 96
    %v958 = vpop.permute.xlu0 %957
    %v959 = vsel %vm54, %v958, 0
    %961 = vmatpush.msra.mxu0 0.0
    %962 = vmatpush.msra.mxu0 0.0
    %963 = vmatpush.msra.mxu0 0.0
    %964 = vmatpush.msra.mxu0 0.0
    %965 = vmatpush.msra.mxu0 0.0
    %966 = vmatpush.msra.mxu0 0.0
    %967 = vmatpush.msra.mxu0 0.0
    %968 = vmatpush.msra.mxu0 0.0
    %969 = vmatpush.msra.mxu0 0.0
    %970 = vmatpush.msra.mxu0 0.0
    %971 = vmatpush.msra.mxu0 0.0
    %972 = vmatpush.msra.mxu0 0.0
    %973 = vmatpush.msra.mxu0 %v955
    %974 = vmatpush.msra.mxu0 %v954
    %975 = vmatpush.msra.mxu0 %v953
    %976 = vmatpush.msra.mxu0 %v952
    %977 = vmatmul.f32.gmra.mxu0 %v959
    %v978 = vpop.f32.mrf.mxu0
    %v979 = vadd.f32 0.0, %v978
    %980 = vdwg.mxu0
    %v981 = vadd.f32 %v951, %v979
    %v982 = vxor.u32 %v981, 2147483648
    %v983 = vmul.f32 %v982, 1.442695
    %v984 = vpow.pop %v983
    %v985 = vadd.f32 %v984, 1.0
    %v986 = vrcp.pop %v985
    %v987 = vmul.f32 %v985, %v986
    %v988 = vsub.f32 1.0, %v987
    %v989 = vmul.f32 %v986, %v988
    %v990 = vadd.f32 %v986, %v989
    %vm991 = vweird.f32 %v985
    %vm992 = vweird.f32 %v986
    %vm993 = vmor %vm991, %vm992
    %v994 = vsel %vm993, %v986, %v990
    %v995 = vand.u32 2147483647, %v985
    %vm996 = vcmp.eq.f32.partialorder %v995, 8.507059e+37
    %v997 = vand.u32 %v985, 2147483648
    %v998 = vor.u32 1.1754944e-38, %v997
    %v999 = vsel %vm996, %v998, %v994
    %v1000 = vmul.f32 1.0, %v999
    %v1001 = vadd.f32 %v979, %v234
    %1003 = vrot.lane.b32.xlu0 %v1001, 64
    %v1004 = vpop.permute.xlu0 %1003
    %v1006 = vmul.f32 %v1000, %v1004
    %1008 = vrot.lane.b32.xlu0 %v1006, 64
    %v1009 = vpop.permute.xlu0 %1008
    %v1011 = vadd.f32 %v951, %v1009
    %v1012 = vtanh.pop %v1011
    %v1013 = vsub.f32 1.0, %v1000
    %1015 = vrot.lane.b32.xlu0 %v1012, 96
    %v1016 = vpop.permute.xlu0 %1015
    %v1018 = vmul.f32 %v1013, %v1016
    %v1019 = vmul.f32 %v1000, %v930
    %v1020 = vadd.f32 %v1018, %v1019
    %v1021 = vld [vmem:[%s760] sm:$0xff]
    %v1022 = vld [vmem:[%s760 + $0x8] sm:$0xff]
    %v1023 = vld [vmem:[%s4] sm:$0xff]
    %v1024 = vld [vmem:[%s4 + $0x8] sm:$0xff]
    %v1025 = vld [vmem:[%s4 + $0x10] sm:$0xff]
    %v1026 = vld [vmem:[%s4 + $0x18] sm:$0xff]
    %v1028 = vsel %vm54, %v936, 0
    %1030 = vmatpush.msra.mxu0 0.0
    %1031 = vmatpush.msra.mxu0 0.0
    %1032 = vmatpush.msra.mxu0 0.0
    %1033 = vmatpush.msra.mxu0 0.0
    %1034 = vmatpush.msra.mxu0 0.0
    %1035 = vmatpush.msra.mxu0 0.0
    %1036 = vmatpush.msra.mxu0 0.0
    %1037 = vmatpush.msra.mxu0 0.0
    %1038 = vmatpush.msra.mxu0 0.0
    %1039 = vmatpush.msra.mxu0 0.0
    %1040 = vmatpush.msra.mxu0 0.0
    %1041 = vmatpush.msra.mxu0 0.0
    %1042 = vmatpush.msra.mxu0 %v1026
    %1043 = vmatpush.msra.mxu0 %v1025
    %1044 = vmatpush.msra.mxu0 %v1024
    %1045 = vmatpush.msra.mxu0 %v1023
    %1046 = vmatmul.f32.gmra.mxu0 %v1028
    %v1047 = vpop.f32.mrf.mxu0
    %v1048 = vadd.f32 0.0, %v1047
    %1049 = vdwg.mxu0
    %1051 = vrot.lane.b32.xlu0 %v1048, 96
    %v1052 = vpop.permute.xlu0 %1051
    %v1054 = vadd.f32 %v1021, %v1052
    %v1055 = vxor.u32 %v1054, 2147483648
    %v1056 = vmul.f32 %v1055, 1.442695
    %v1057 = vpow.pop %v1056
    %v1058 = vadd.f32 %v1057, 1.0
    %v1059 = vrcp.pop %v1058
    %v1060 = vmul.f32 %v1058, %v1059
    %v1061 = vsub.f32 1.0, %v1060
    %v1062 = vmul.f32 %v1059, %v1061
    %v1063 = vadd.f32 %v1059, %v1062
    %vm1064 = vweird.f32 %v1058
    %vm1065 = vweird.f32 %v1059
    %vm1066 = vmor %vm1064, %vm1065
    %v1067 = vsel %vm1066, %v1059, %v1063
    %v1068 = vand.u32 2147483647, %v1058
    %vm1069 = vcmp.eq.f32.partialorder %v1068, 8.507059e+37
    %v1070 = vand.u32 %v1058, 2147483648
    %v1071 = vor.u32 1.1754944e-38, %v1070
    %v1072 = vsel %vm1069, %v1071, %v1067
    %v1073 = vmul.f32 1.0, %v1072
    %v1074 = vadd.f32 %v1022, %v1052
    %v1075 = vxor.u32 %v1074, 2147483648
    %v1076 = vmul.f32 %v1075, 1.442695
    %v1077 = vpow.pop %v1076
    %v1078 = vadd.f32 %v1077, 1.0
    %v1079 = vrcp.pop %v1078
    %v1080 = vmul.f32 %v1078, %v1079
    %v1081 = vsub.f32 1.0, %v1080
    %v1082 = vmul.f32 %v1079, %v1081
    %v1083 = vadd.f32 %v1079, %v1082
    %vm1084 = vweird.f32 %v1078
    %vm1085 = vweird.f32 %v1079
    %vm1086 = vmor %vm1084, %vm1085
    %v1087 = vsel %vm1086, %v1079, %v1083
    %v1088 = vand.u32 2147483647, %v1078
    %vm1089 = vcmp.eq.f32.partialorder %v1088, 8.507059e+37
    %v1090 = vand.u32 %v1078, 2147483648
    %v1091 = vor.u32 1.1754944e-38, %v1090
    %v1092 = vsel %vm1089, %v1091, %v1087
    %v1093 = vmul.f32 1.0, %v1092
    %v1094 = vadd.f32 %v1048, %v330
    %1096 = vrot.lane.b32.xlu0 %v1094, 32
    %v1097 = vpop.permute.xlu0 %1096
    %v1099 = vmul.f32 %v1073, %v1097
    %1101 = vrot.lane.b32.xlu0 %v1099, 64
    %v1102 = vpop.permute.xlu0 %1101
    %v1104 = vadd.f32 %v1022, %v1102
    %v1105 = vtanh.pop %v1104
    %v1106 = vsub.f32 1.0, %v1093
    %1108 = vrot.lane.b32.xlu0 %v1105, 96
    %v1109 = vpop.permute.xlu0 %1108
    %v1111 = vmul.f32 %v1106, %v1109
    %v1112 = vmul.f32 %v1093, %v936
    %v1113 = vadd.f32 %v1111, %v1112
    %v1114 = vsel %vm935, %v1020, %v930
    %v1115 = vsel %vm929, %v1113, %v936
    %v1116 = vsel %vm935, %v1020, 0.0
    %1118 = vrot.lane.b32.xlu0 %v1116, 96
    %v1119 = vpop.permute.xlu0 %1118
    %1121 = vst.msk [vmem:[%s949] sm:$0xff] %vm54, %v1119
    %v1122 = vsel %vm929, %v1113, 0.0
    %1124 = vrot.lane.b32.xlu0 %v1122, 32
    %v1125 = vpop.permute.xlu0 %1124
    %1127 = vst.msk [vmem:[%s942] sm:$0xff] %vm374, %v1125
    %v1128 = vld [vmem:[%s638] sm:$0xff]
    %v1129 = vld [vmem:[%s3] sm:$0xff]
    %v1130 = vld [vmem:[%s3 + $0x8] sm:$0xff]
    %v1131 = vld [vmem:[%s3 + $0x10] sm:$0xff]
    %v1132 = vld [vmem:[%s3 + $0x18] sm:$0xff]
    %1134 = vrot.lane.b32.xlu0 %v1114, 96
    %v1135 = vpop.permute.xlu0 %1134
    %v1136 = vsel %vm54, %v1135, 0
    %1138 = vmatpush.msra.mxu0 0.0
    %1139 = vmatpush.msra.mxu0 0.0
    %1140 = vmatpush.msra.mxu0 0.0
    %1141 = vmatpush.msra.mxu0 0.0
    %1142 = vmatpush.msra.mxu0 0.0
    %1143 = vmatpush.msra.mxu0 0.0
    %1144 = vmatpush.msra.mxu0 0.0
    %1145 = vmatpush.msra.mxu0 0.0
    %1146 = vmatpush.msra.mxu0 0.0
    %1147 = vmatpush.msra.mxu0 0.0
    %1148 = vmatpush.msra.mxu0 0.0
    %1149 = vmatpush.msra.mxu0 0.0
    %1150 = vmatpush.msra.mxu0 %v1132
    %1151 = vmatpush.msra.mxu0 %v1131
    %1152 = vmatpush.msra.mxu0 %v1130
    %1153 = vmatpush.msra.mxu0 %v1129
    %1154 = vmatmul.f32.gmra.mxu0 %v1136
    %v1155 = vpop.f32.mrf.mxu0
    %v1156 = vadd.f32 0.0, %v1155
    %1157 = vdwg.mxu0
    %v1158 = vadd.f32 %v1128, %v1156
    %v1159 = vxor.u32 %v1158, 2147483648
    %v1160 = vmul.f32 %v1159, 1.442695
    %v1161 = vpow.pop %v1160
    %v1162 = vadd.f32 %v1161, 1.0
    %v1163 = vrcp.pop %v1162
    %v1164 = vmul.f32 %v1162, %v1163
    %v1165 = vsub.f32 1.0, %v1164
    %v1166 = vmul.f32 %v1163, %v1165
    %v1167 = vadd.f32 %v1163, %v1166
    %vm1168 = vweird.f32 %v1162
    %vm1169 = vweird.f32 %v1163
    %vm1170 = vmor %vm1168, %vm1169
    %v1171 = vsel %vm1170, %v1163, %v1167
    %v1172 = vand.u32 2147483647, %v1162
    %vm1173 = vcmp.eq.f32.partialorder %v1172, 8.507059e+37
    %v1174 = vand.u32 %v1162, 2147483648
    %v1175 = vor.u32 1.1754944e-38, %v1174
    %v1176 = vsel %vm1173, %v1175, %v1171
    %v1177 = vmul.f32 1.0, %v1176
    %v1178 = vadd.f32 %v1156, %v234
    %1180 = vrot.lane.b32.xlu0 %v1178, 64
    %v1181 = vpop.permute.xlu0 %1180
    %v1183 = vmul.f32 %v1177, %v1181
    %1185 = vrot.lane.b32.xlu0 %v1183, 64
    %v1186 = vpop.permute.xlu0 %1185
    %v1188 = vadd.f32 %v1128, %v1186
    %v1189 = vtanh.pop %v1188
    %v1190 = vsub.f32 1.0, %v1177
    %1192 = vrot.lane.b32.xlu0 %v1189, 96
    %v1193 = vpop.permute.xlu0 %1192
    %v1195 = vmul.f32 %v1190, %v1193
    %v1196 = vmul.f32 %v1177, %v1114
    %v1197 = vadd.f32 %v1195, %v1196
    %v1198 = vld [vmem:[%s567] sm:$0xff]
    %v1199 = vld [vmem:[%s567 + $0x8] sm:$0xff]
    %v1200 = vld [vmem:[%s4] sm:$0xff]
    %v1201 = vld [vmem:[%s4 + $0x8] sm:$0xff]
    %v1202 = vld [vmem:[%s4 + $0x10] sm:$0xff]
    %v1203 = vld [vmem:[%s4 + $0x18] sm:$0xff]
    %v1205 = vsel %vm54, %v1115, 0
    %1207 = vmatpush.msra.mxu0 0.0
    %1208 = vmatpush.msra.mxu0 0.0
    %1209 = vmatpush.msra.mxu0 0.0
    %1210 = vmatpush.msra.mxu0 0.0
    %1211 = vmatpush.msra.mxu0 0.0
    %1212 = vmatpush.msra.mxu0 0.0
    %1213 = vmatpush.msra.mxu0 0.0
    %1214 = vmatpush.msra.mxu0 0.0
    %1215 = vmatpush.msra.mxu0 0.0
    %1216 = vmatpush.msra.mxu0 0.0
    %1217 = vmatpush.msra.mxu0 0.0
    %1218 = vmatpush.msra.mxu0 0.0
    %1219 = vmatpush.msra.mxu0 %v1203
    %1220 = vmatpush.msra.mxu0 %v1202
    %1221 = vmatpush.msra.mxu0 %v1201
    %1222 = vmatpush.msra.mxu0 %v1200
    %1223 = vmatmul.f32.gmra.mxu0 %v1205
    %v1224 = vpop.f32.mrf.mxu0
    %v1225 = vadd.f32 0.0, %v1224
    %1226 = vdwg.mxu0
    %1228 = vrot.lane.b32.xlu0 %v1225, 96
    %v1229 = vpop.permute.xlu0 %1228
    %v1231 = vadd.f32 %v1198, %v1229
    %v1232 = vxor.u32 %v1231, 2147483648
    %v1233 = vmul.f32 %v1232, 1.442695
    %v1234 = vpow.pop %v1233
    %v1235 = vadd.f32 %v1234, 1.0
    %v1236 = vrcp.pop %v1235
    %v1237 = vmul.f32 %v1235, %v1236
    %v1238 = vsub.f32 1.0, %v1237
    %v1239 = vmul.f32 %v1236, %v1238
    %v1240 = vadd.f32 %v1236, %v1239
    %vm1241 = vweird.f32 %v1235
    %vm1242 = vweird.f32 %v1236
    %vm1243 = vmor %vm1241, %vm1242
    %v1244 = vsel %vm1243, %v1236, %v1240
    %v1245 = vand.u32 2147483647, %v1235
    %vm1246 = vcmp.eq.f32.partialorder %v1245, 8.507059e+37
    %v1247 = vand.u32 %v1235, 2147483648
    %v1248 = vor.u32 1.1754944e-38, %v1247
    %v1249 = vsel %vm1246, %v1248, %v1244
    %v1250 = vmul.f32 1.0, %v1249
    %v1251 = vadd.f32 %v1199, %v1229
    %v1252 = vxor.u32 %v1251, 2147483648
    %v1253 = vmul.f32 %v1252, 1.442695
    %v1254 = vpow.pop %v1253
    %v1255 = vadd.f32 %v1254, 1.0
    %v1256 = vrcp.pop %v1255
    %v1257 = vmul.f32 %v1255, %v1256
    %v1258 = vsub.f32 1.0, %v1257
    %v1259 = vmul.f32 %v1256, %v1258
    %v1260 = vadd.f32 %v1256, %v1259
    %vm1261 = vweird.f32 %v1255
    %vm1262 = vweird.f32 %v1256
    %vm1263 = vmor %vm1261, %vm1262
    %v1264 = vsel %vm1263, %v1256, %v1260
    %v1265 = vand.u32 2147483647, %v1255
    %vm1266 = vcmp.eq.f32.partialorder %v1265, 8.507059e+37
    %v1267 = vand.u32 %v1255, 2147483648
    %v1268 = vor.u32 1.1754944e-38, %v1267
    %v1269 = vsel %vm1266, %v1268, %v1264
    %v1270 = vmul.f32 1.0, %v1269
    %v1271 = vadd.f32 %v1225, %v330
    %1273 = vrot.lane.b32.xlu0 %v1271, 32
    %v1274 = vpop.permute.xlu0 %1273
    %v1276 = vmul.f32 %v1250, %v1274
    %1278 = vrot.lane.b32.xlu0 %v1276, 64
    %v1279 = vpop.permute.xlu0 %1278
    %v1281 = vadd.f32 %v1199, %v1279
    %v1282 = vtanh.pop %v1281
    %v1283 = vsub.f32 1.0, %v1270
    %1285 = vrot.lane.b32.xlu0 %v1282, 96
    %v1286 = vpop.permute.xlu0 %1285
    %v1288 = vmul.f32 %v1283, %v1286
    %v1289 = vmul.f32 %v1270, %v1115
    %v1290 = vadd.f32 %v1288, %v1289
    %v1291 = vsel %vm742, %v1197, %v1114
    %v1292 = vsel %vm736, %v1290, %v1115
    %v1293 = vsel %vm742, %v1197, 0.0
    %1295 = vrot.lane.b32.xlu0 %v1293, 96
    %v1296 = vpop.permute.xlu0 %1295
    %1298 = vst.msk [vmem:[%s756] sm:$0xff] %vm54, %v1296
    %v1299 = vsel %vm736, %v1290, 0.0
    %1301 = vrot.lane.b32.xlu0 %v1299, 32
    %v1302 = vpop.permute.xlu0 %1301
    %1304 = vst.msk [vmem:[%s749] sm:$0xff] %vm374, %v1302
    %v1305 = vld [vmem:[%s446] sm:$0xff]
    %v1306 = vld [vmem:[%s3] sm:$0xff]
    %v1307 = vld [vmem:[%s3 + $0x8] sm:$0xff]
    %v1308 = vld [vmem:[%s3 + $0x10] sm:$0xff]
    %v1309 = vld [vmem:[%s3 + $0x18] sm:$0xff]
    %1311 = vrot.lane.b32.xlu0 %v1291, 96
    %v1312 = vpop.permute.xlu0 %1311
    %v1313 = vsel %vm54, %v1312, 0
    %1315 = vmatpush.msra.mxu0 0.0
    %1316 = vmatpush.msra.mxu0 0.0
    %1317 = vmatpush.msra.mxu0 0.0
    %1318 = vmatpush.msra.mxu0 0.0
    %1319 = vmatpush.msra.mxu0 0.0
    %1320 = vmatpush.msra.mxu0 0.0
    %1321 = vmatpush.msra.mxu0 0.0
    %1322 = vmatpush.msra.mxu0 0.0
    %1323 = vmatpush.msra.mxu0 0.0
    %1324 = vmatpush.msra.mxu0 0.0
    %1325 = vmatpush.msra.mxu0 0.0
    %1326 = vmatpush.msra.mxu0 0.0
    %1327 = vmatpush.msra.mxu0 %v1309
    %1328 = vmatpush.msra.mxu0 %v1308
    %1329 = vmatpush.msra.mxu0 %v1307
    %1330 = vmatpush.msra.mxu0 %v1306
    %1331 = vmatmul.f32.gmra.mxu0 %v1313
    %v1332 = vpop.f32.mrf.mxu0
    %v1333 = vadd.f32 0.0, %v1332
    %1334 = vdwg.mxu0
    %v1335 = vadd.f32 %v1305, %v1333
    %v1336 = vxor.u32 %v1335, 2147483648
    %v1337 = vmul.f32 %v1336, 1.442695
    %v1338 = vpow.pop %v1337
    %v1339 = vadd.f32 %v1338, 1.0
    %v1340 = vrcp.pop %v1339
    %v1341 = vmul.f32 %v1339, %v1340
    %v1342 = vsub.f32 1.0, %v1341
    %v1343 = vmul.f32 %v1340, %v1342
    %v1344 = vadd.f32 %v1340, %v1343
    %vm1345 = vweird.f32 %v1339
    %vm1346 = vweird.f32 %v1340
    %vm1347 = vmor %vm1345, %vm1346
    %v1348 = vsel %vm1347, %v1340, %v1344
    %v1349 = vand.u32 2147483647, %v1339
    %vm1350 = vcmp.eq.f32.partialorder %v1349, 8.507059e+37
    %v1351 = vand.u32 %v1339, 2147483648
    %v1352 = vor.u32 1.1754944e-38, %v1351
    %v1353 = vsel %vm1350, %v1352, %v1348
    %v1354 = vmul.f32 1.0, %v1353
    %v1355 = vadd.f32 %v1333, %v234
    %1357 = vrot.lane.b32.xlu0 %v1355, 64
    %v1358 = vpop.permute.xlu0 %1357
    %v1360 = vmul.f32 %v1354, %v1358
    %1362 = vrot.lane.b32.xlu0 %v1360, 64
    %v1363 = vpop.permute.xlu0 %1362
    %v1365 = vadd.f32 %v1305, %v1363
    %v1366 = vtanh.pop %v1365
    %v1367 = vsub.f32 1.0, %v1354
    %1369 = vrot.lane.b32.xlu0 %v1366, 96
    %v1370 = vpop.permute.xlu0 %1369
    %v1372 = vmul.f32 %v1367, %v1370
    %v1373 = vmul.f32 %v1354, %v1291
    %v1374 = vadd.f32 %v1372, %v1373
    %v1375 = vld [vmem:[%s378] sm:$0xff]
    %v1376 = vld [vmem:[%s378 + $0x8] sm:$0xff]
    %v1377 = vld [vmem:[%s4] sm:$0xff]
    %v1378 = vld [vmem:[%s4 + $0x8] sm:$0xff]
    %v1379 = vld [vmem:[%s4 + $0x10] sm:$0xff]
    %v1380 = vld [vmem:[%s4 + $0x18] sm:$0xff]
    %v1382 = vsel %vm54, %v1292, 0
    %1384 = vmatpush.msra.mxu0 0.0
    %1385 = vmatpush.msra.mxu0 0.0
    %1386 = vmatpush.msra.mxu0 0.0
    %1387 = vmatpush.msra.mxu0 0.0
    %1388 = vmatpush.msra.mxu0 0.0
    %1389 = vmatpush.msra.mxu0 0.0
    %1390 = vmatpush.msra.mxu0 0.0
    %1391 = vmatpush.msra.mxu0 0.0
    %1392 = vmatpush.msra.mxu0 0.0
    %1393 = vmatpush.msra.mxu0 0.0
    %1394 = vmatpush.msra.mxu0 0.0
    %1395 = vmatpush.msra.mxu0 0.0
    %1396 = vmatpush.msra.mxu0 %v1380
    %1397 = vmatpush.msra.mxu0 %v1379
    %1398 = vmatpush.msra.mxu0 %v1378
    %1399 = vmatpush.msra.mxu0 %v1377
    %1400 = vmatmul.f32.gmra.mxu0 %v1382
    %v1401 = vpop.f32.mrf.mxu0
    %v1402 = vadd.f32 0.0, %v1401
    %1403 = vdwg.mxu0
    %1405 = vrot.lane.b32.xlu0 %v1402, 96
    %v1406 = vpop.permute.xlu0 %1405
    %v1408 = vadd.f32 %v1375, %v1406
    %v1409 = vxor.u32 %v1408, 2147483648
    %v1410 = vmul.f32 %v1409, 1.442695
    %v1411 = vpow.pop %v1410
    %v1412 = vadd.f32 %v1411, 1.0
    %v1413 = vrcp.pop %v1412
    %v1414 = vmul.f32 %v1412, %v1413
    %v1415 = vsub.f32 1.0, %v1414
    %v1416 = vmul.f32 %v1413, %v1415
    %v1417 = vadd.f32 %v1413, %v1416
    %vm1418 = vweird.f32 %v1412
    %vm1419 = vweird.f32 %v1413
    %vm1420 = vmor %vm1418, %vm1419
    %v1421 = vsel %vm1420, %v1413, %v1417
    %v1422 = vand.u32 2147483647, %v1412
    %vm1423 = vcmp.eq.f32.partialorder %v1422, 8.507059e+37
    %v1424 = vand.u32 %v1412, 2147483648
    %v1425 = vor.u32 1.1754944e-38, %v1424
    %v1426 = vsel %vm1423, %v1425, %v1421
    %v1427 = vmul.f32 1.0, %v1426
    %v1428 = vadd.f32 %v1376, %v1406
    %v1429 = vxor.u32 %v1428, 2147483648
    %v1430 = vmul.f32 %v1429, 1.442695
    %v1431 = vpow.pop %v1430
    %v1432 = vadd.f32 %v1431, 1.0
    %v1433 = vrcp.pop %v1432
    %v1434 = vmul.f32 %v1432, %v1433
    %v1435 = vsub.f32 1.0, %v1434
    %v1436 = vmul.f32 %v1433, %v1435
    %v1437 = vadd.f32 %v1433, %v1436
    %vm1438 = vweird.f32 %v1432
    %vm1439 = vweird.f32 %v1433
    %vm1440 = vmor %vm1438, %vm1439
    %v1441 = vsel %vm1440, %v1433, %v1437
    %v1442 = vand.u32 2147483647, %v1432
    %vm1443 = vcmp.eq.f32.partialorder %v1442, 8.507059e+37
    %v1444 = vand.u32 %v1432, 2147483648
    %v1445 = vor.u32 1.1754944e-38, %v1444
    %v1446 = vsel %vm1443, %v1445, %v1441
    %v1447 = vmul.f32 1.0, %v1446
    %v1448 = vadd.f32 %v1402, %v330
    %1450 = vrot.lane.b32.xlu0 %v1448, 32
    %v1451 = vpop.permute.xlu0 %1450
    %v1453 = vmul.f32 %v1427, %v1451
    %1455 = vrot.lane.b32.xlu0 %v1453, 64
    %v1456 = vpop.permute.xlu0 %1455
    %v1458 = vadd.f32 %v1376, %v1456
    %v1459 = vtanh.pop %v1458
    %v1460 = vsub.f32 1.0, %v1447
    %1462 = vrot.lane.b32.xlu0 %v1459, 96
    %v1463 = vpop.permute.xlu0 %1462
    %v1465 = vmul.f32 %v1460, %v1463
    %v1466 = vmul.f32 %v1447, %v1292
    %v1467 = vadd.f32 %v1465, %v1466
    %v1468 = vsel %vm549, %v1374, %v1291
    %v1469 = vsel %vm543, %v1467, %v1292
    %v1470 = vsel %vm549, %v1374, 0.0
    %1472 = vrot.lane.b32.xlu0 %v1470, 96
    %v1473 = vpop.permute.xlu0 %1472
    %1475 = vst.msk [vmem:[%s563] sm:$0xff] %vm54, %v1473
    %v1476 = vsel %vm543, %v1467, 0.0
    %1478 = vrot.lane.b32.xlu0 %v1476, 32
    %v1479 = vpop.permute.xlu0 %1478
    %1481 = vst.msk [vmem:[%s556] sm:$0xff] %vm374, %v1479
    %v1482 = vld [vmem:[%s256] sm:$0xff]
    %v1483 = vld [vmem:[%s3] sm:$0xff]
    %v1484 = vld [vmem:[%s3 + $0x8] sm:$0xff]
    %v1485 = vld [vmem:[%s3 + $0x10] sm:$0xff]
    %v1486 = vld [vmem:[%s3 + $0x18] sm:$0xff]
    %1488 = vrot.lane.b32.xlu0 %v1468, 96
    %v1489 = vpop.permute.xlu0 %1488
    %v1490 = vsel %vm54, %v1489, 0
    %1492 = vmatpush.msra.mxu0 0.0
    %1493 = vmatpush.msra.mxu0 0.0
    %1494 = vmatpush.msra.mxu0 0.0
    %1495 = vmatpush.msra.mxu0 0.0
    %1496 = vmatpush.msra.mxu0 0.0
    %1497 = vmatpush.msra.mxu0 0.0
    %1498 = vmatpush.msra.mxu0 0.0
    %1499 = vmatpush.msra.mxu0 0.0
    %1500 = vmatpush.msra.mxu0 0.0
    %1501 = vmatpush.msra.mxu0 0.0
    %1502 = vmatpush.msra.mxu0 0.0
    %1503 = vmatpush.msra.mxu0 0.0
    %1504 = vmatpush.msra.mxu0 %v1486
    %1505 = vmatpush.msra.mxu0 %v1485
    %1506 = vmatpush.msra.mxu0 %v1484
    %1507 = vmatpush.msra.mxu0 %v1483
    %1508 = vmatmul.f32.gmra.mxu0 %v1490
    %v1509 = vpop.f32.mrf.mxu0
    %v1510 = vadd.f32 0.0, %v1509
    %1511 = vdwg.mxu0
    %v1512 = vadd.f32 %v1482, %v1510
    %v1513 = vxor.u32 %v1512, 2147483648
    %v1514 = vmul.f32 %v1513, 1.442695
    %v1515 = vpow.pop %v1514
    %v1516 = vadd.f32 %v1515, 1.0
    %v1517 = vrcp.pop %v1516
    %v1518 = vmul.f32 %v1516, %v1517
    %v1519 = vsub.f32 1.0, %v1518
    %v1520 = vmul.f32 %v1517, %v1519
    %v1521 = vadd.f32 %v1517, %v1520
    %vm1522 = vweird.f32 %v1516
    %vm1523 = vweird.f32 %v1517
    %vm1524 = vmor %vm1522, %vm1523
    %v1525 = vsel %vm1524, %v1517, %v1521
    %v1526 = vand.u32 2147483647, %v1516
    %vm1527 = vcmp.eq.f32.partialorder %v1526, 8.507059e+37
    %v1528 = vand.u32 %v1516, 2147483648
    %v1529 = vor.u32 1.1754944e-38, %v1528
    %v1530 = vsel %vm1527, %v1529, %v1525
    %v1531 = vmul.f32 1.0, %v1530
    %v1532 = vadd.f32 %v1510, %v234
    %1534 = vrot.lane.b32.xlu0 %v1532, 64
    %v1535 = vpop.permute.xlu0 %1534
    %v1537 = vmul.f32 %v1531, %v1535
    %1539 = vrot.lane.b32.xlu0 %v1537, 64
    %v1540 = vpop.permute.xlu0 %1539
    %v1542 = vadd.f32 %v1482, %v1540
    %v1543 = vtanh.pop %v1542
    %v1544 = vsub.f32 1.0, %v1531
    %1546 = vrot.lane.b32.xlu0 %v1543, 96
    %v1547 = vpop.permute.xlu0 %1546
    %v1549 = vmul.f32 %v1544, %v1547
    %v1550 = vmul.f32 %v1531, %v1468
    %v1551 = vadd.f32 %v1549, %v1550
    %v1552 = vld [vmem:[#allocation2] sm:$0xff]
    %v1553 = vld [vmem:[#allocation2 + $0x8] sm:$0xff]
    %v1554 = vld [vmem:[%s4] sm:$0xff]
    %v1555 = vld [vmem:[%s4 + $0x8] sm:$0xff]
    %v1556 = vld [vmem:[%s4 + $0x10] sm:$0xff]
    %v1557 = vld [vmem:[%s4 + $0x18] sm:$0xff]
    %v1559 = vsel %vm54, %v1469, 0
    %1561 = vmatpush.msra.mxu0 0.0
    %1562 = vmatpush.msra.mxu0 0.0
    %1563 = vmatpush.msra.mxu0 0.0
    %1564 = vmatpush.msra.mxu0 0.0
    %1565 = vmatpush.msra.mxu0 0.0
    %1566 = vmatpush.msra.mxu0 0.0
    %1567 = vmatpush.msra.mxu0 0.0
    %1568 = vmatpush.msra.mxu0 0.0
    %1569 = vmatpush.msra.mxu0 0.0
    %1570 = vmatpush.msra.mxu0 0.0
    %1571 = vmatpush.msra.mxu0 0.0
    %1572 = vmatpush.msra.mxu0 0.0
    %1573 = vmatpush.msra.mxu0 %v1557
    %1574 = vmatpush.msra.mxu0 %v1556
    %1575 = vmatpush.msra.mxu0 %v1555
    %1576 = vmatpush.msra.mxu0 %v1554
    %1577 = vmatmul.f32.gmra.mxu0 %v1559
    %v1578 = vpop.f32.mrf.mxu0
    %v1579 = vadd.f32 0.0, %v1578
    %1580 = vdwg.mxu0
    %1582 = vrot.lane.b32.xlu0 %v1579, 96
    %v1583 = vpop.permute.xlu0 %1582
    %v1585 = vadd.f32 %v1552, %v1583
    %v1586 = vxor.u32 %v1585, 2147483648
    %v1587 = vmul.f32 %v1586, 1.442695
    %v1588 = vpow.pop %v1587
    %v1589 = vadd.f32 %v1588, 1.0
    %v1590 = vrcp.pop %v1589
    %v1591 = vmul.f32 %v1589, %v1590
    %v1592 = vsub.f32 1.0, %v1591
    %v1593 = vmul.f32 %v1590, %v1592
    %v1594 = vadd.f32 %v1590, %v1593
    %vm1595 = vweird.f32 %v1589
    %vm1596 = vweird.f32 %v1590
    %vm1597 = vmor %vm1595, %vm1596
    %v1598 = vsel %vm1597, %v1590, %v1594
    %v1599 = vand.u32 2147483647, %v1589
    %vm1600 = vcmp.eq.f32.partialorder %v1599, 8.507059e+37
    %v1601 = vand.u32 %v1589, 2147483648
    %v1602 = vor.u32 1.1754944e-38, %v1601
    %v1603 = vsel %vm1600, %v1602, %v1598
    %v1604 = vmul.f32 1.0, %v1603
    %v1605 = vadd.f32 %v1553, %v1583
    %v1606 = vxor.u32 %v1605, 2147483648
    %v1607 = vmul.f32 %v1606, 1.442695
    %v1608 = vpow.pop %v1607
    %v1609 = vadd.f32 %v1608, 1.0
    %v1610 = vrcp.pop %v1609
    %v1611 = vmul.f32 %v1609, %v1610
    %v1612 = vsub.f32 1.0, %v1611
    %v1613 = vmul.f32 %v1610, %v1612
    %v1614 = vadd.f32 %v1610, %v1613
    %vm1615 = vweird.f32 %v1609
    %vm1616 = vweird.f32 %v1610
    %vm1617 = vmor %vm1615, %vm1616
    %v1618 = vsel %vm1617, %v1610, %v1614
    %v1619 = vand.u32 2147483647, %v1609
    %vm1620 = vcmp.eq.f32.partialorder %v1619, 8.507059e+37
    %v1621 = vand.u32 %v1609, 2147483648
    %v1622 = vor.u32 1.1754944e-38, %v1621
    %v1623 = vsel %vm1620, %v1622, %v1618
    %v1624 = vmul.f32 1.0, %v1623
    %v1625 = vadd.f32 %v1579, %v330
    %1627 = vrot.lane.b32.xlu0 %v1625, 32
    %v1628 = vpop.permute.xlu0 %1627
    %v1630 = vmul.f32 %v1604, %v1628
    %1632 = vrot.lane.b32.xlu0 %v1630, 64
    %v1633 = vpop.permute.xlu0 %1632
    %v1635 = vadd.f32 %v1553, %v1633
    %v1636 = vtanh.pop %v1635
    %v1637 = vsub.f32 1.0, %v1624
    %1639 = vrot.lane.b32.xlu0 %v1636, 96
    %v1640 = vpop.permute.xlu0 %1639
    %v1642 = vmul.f32 %v1637, %v1640
    %v1643 = vmul.f32 %v1624, %v1469
    %v1644 = vadd.f32 %v1642, %v1643
    %v1645 = vsel %vm362, %v1551, %v1468
    %v1646 = vsel %vm356, %v1644, %v1469
    %v1647 = vsel %vm362, %v1551, 0.0
    %1649 = vrot.lane.b32.xlu0 %v1647, 96
    %v1650 = vpop.permute.xlu0 %1649
    %1652 = vst.msk [vmem:[%s373] sm:$0xff] %vm54, %v1650
    %v1653 = vsel %vm356, %v1644, 0.0
    %1655 = vrot.lane.b32.xlu0 %v1653, 32
    %v1656 = vpop.permute.xlu0 %1655
    %1658 = vst.msk [vmem:[%s8] sm:$0xff] %vm374, %v1656
    %1660 = vrot.lane.b32.xlu0 %v1645, 96
    %v1661 = vpop.permute.xlu0 %1660
    %1663 = vst.msk [vmem:[#allocation3] sm:$0xff] %vm54, %v1661
    %1665 = vrot.lane.b32.xlu0 %v1646, 32
    %v1666 = vpop.permute.xlu0 %1665
    %1668 = vst.msk [vmem:[#allocation3] sm:$0xff] %vm374, %v1666
    // Predicated region
    $region34: #{_lambda_.1} parent=1 // pred_check
      _
    $region35: #{_lambda_.1} parent=1 // pred_check_branch
      %1670 = sbr.rel (0) target = $region37
    $region36: #{_lambda_.1} parent=1 // pred_region
      _
    $region37: #{_lambda_.1} parent=1 // pred_fallthru
      _
    // Predicated region
    $region38: #{_lambda_.1} parent=1 // pred_check
      _
    $region39: #{_lambda_.1} parent=1 // pred_check_branch
      %1672 = sbr.rel (0) target = $region41
    $region40: #{_lambda_.1} parent=1 // pred_region
      %1674 = vsyncadd [#allocation4], 0
      %s1676 = sshll.u32 [#allocation3], 4
      %s1677 = int_to_ptr.vmem [resolvable:$true] %s1676
      %s1678 = sshll.u32 %s9, 4
      %s1679 = int_to_ptr.hbm [resolvable:$true] %s1678
      %1681 = dma.vmem_to_hbm [thread:$0]  %s1677, 128, %s1679, [#allocation4]
    $region41: #{_lambda_.1} parent=1 // pred_fallthru
      _
    // Predicated region
    $region42: #{_lambda_.1} parent=1 // pred_check
      _
    $region43: #{_lambda_.1} parent=1 // pred_check_branch
      %1683 = sbr.rel (0) target = $region45
    $region44: #{_lambda_.1} parent=1 // pred_region
      _
    $region45: #{_lambda_.1} parent=1 // pred_fallthru
      _
    // Predicated region
    $region46: #{_lambda_.1} parent=1 // pred_check
      _
    $region47: #{_lambda_.1} parent=1 // pred_check_branch
      %1685 = sbr.rel (0) target = $region49
    $region48: #{_lambda_.1} parent=1 // pred_region
      %1687 = dma.done [#allocation4], 128
    $region49: #{_lambda_.1} parent=1 // pred_fallthru
      _
    %1688 = vsyncpa [#allocation4], 1

</llo_original>
